<compile_context>
chip_gen: v5e
topology: v5e:2x2
jax: 0.10.0
libtpu: 0.0.40
codegen_flags: <defaults>
</compile_context>

<pallas_src>
import jax
import jax.numpy as jnp
from jax.experimental import pallas as pl
from jax.experimental.pallas import tpu as pltpu


def _round_up(n, m):
    return ((n + m - 1) // m) * m


def _resident_spec(shape):
    """Constant-index (weight-resident) block.  Constant blocks are never
    re-fetched, so the default second pipeline buffer is pure VMEM waste —
    request single buffering when the installed Pallas supports it."""
    index_map = lambda i, j: (0, 0)
    if hasattr(pl, "Buffered"):
        try:
            return pl.BlockSpec(shape, index_map, pipeline_mode=pl.Buffered(1))
        except TypeError:
            pass
    return pl.BlockSpec(shape, index_map)


def _pick_col_tile(out_pad):
    """fc3 output-column tile: largest divisor of out_pad from a lane-friendly
    candidate list (out_pad is always a multiple of 128, so 128 always works)."""
    for tn in (4096, 2048, 1536, 1024, 512, 384, 256, 128):
        if tn <= out_pad and out_pad % tn == 0:
            return tn
    return out_pad


def decoder_kernel(x_ref, w1_ref, b1_ref, w2_ref, b2_ref, w3_ref, b3_ref,
                   o_ref, h2_ref):
    # fc1 + relu, fc2 + relu: only on the first fc3 column tile of each batch
    # tile.  The bf16 hidden activation is cached in VMEM scratch and reused
    # for every column tile, so the large w3 DMA stream pipelines against the
    # fc3 matmuls instead of being a single exposed load.
    @pl.when(pl.program_id(1) == 0)
    def _():
        h1 = jnp.dot(x_ref[...].astype(jnp.bfloat16), w1_ref[...],
                     preferred_element_type=jnp.float32)
        h1 = jnp.maximum(h1 + b1_ref[...], 0.0)
        h2 = jnp.dot(h1.astype(jnp.bfloat16), w2_ref[...],
                     preferred_element_type=jnp.float32)
        h2 = jnp.maximum(h2 + b2_ref[...], 0.0)
        h2_ref[...] = h2.astype(jnp.bfloat16)

    # fc3 (no activation) on this column tile; output columns lane-padded.
    o_ref[...] = (jnp.dot(h2_ref[...], w3_ref[...],
                          preferred_element_type=jnp.float32) + b3_ref[...])


def prepare_params(params_f32, output_points):
    """One-time prep: cast weights to bf16 (halves weight DMA bytes) and pad
    fc3 weight/bias columns up to a multiple of 128 lanes.  Biases stay f32."""
    w1, b1, w2, b2, w3, b3 = params_f32
    out_dim = output_points * 3
    out_pad = _round_up(out_dim, 128)
    pad = out_pad - out_dim
    w3p = jnp.pad(w3, ((0, 0), (0, pad)))
    b3p = jnp.pad(b3, ((0, 0), (0, pad)))
    return (w1.astype(jnp.bfloat16), b1.astype(jnp.float32),
            w2.astype(jnp.bfloat16), b2.astype(jnp.float32),
            w3p.astype(jnp.bfloat16), b3p.astype(jnp.float32))


def simple_test_decoder(x, prepared_params, output_points):
    """x: (B, latent_dim) f32. Returns (B, output_points, 3) f32."""
    w1, b1, w2, b2, w3, b3 = prepared_params
    B, latent_dim = x.shape
    out_dim = output_points * 3
    out_pad = w3.shape[1]
    h1_dim = w1.shape[1]    # 512
    h2_dim = w2.shape[1]    # 1024

    # fc3 column tiling (inner / "arbitrary" grid axis).
    tn = _pick_col_tile(out_pad)
    nj = out_pad // tn

    # Batch tiling (outer / "parallel" grid axis).  Prefer >=2 tiles so v7x
    # megacore can shard the batch axis across both TensorCores.
    tb = min(256, _round_up(B, 8))
    if _round_up(B, tb) // tb < 2:
        half = _round_up(max(tb // 2, 8), 8)
        if half < tb and _round_up(B, half) // half >= 2:
            tb = half
    b_pad = _round_up(B, tb)
    if b_pad != B:
        x = jnp.pad(x, ((0, b_pad - B), (0, 0)))
    ni = b_pad // tb
    grid = (ni, nj)

    flops = 2 * b_pad * (latent_dim * h1_dim + h1_dim * h2_dim + h2_dim * out_pad)
    bytes_accessed = (b_pad * latent_dim * 4
                      + w1.size * 2 + w2.size * 2 + w3.size * 2
                      + b1.size * 4 + b2.size * 4 + b3.size * 4
                      + b_pad * out_pad * 4)

    # Approximate VMEM footprint: single-buffered resident weights, double-
    # buffered pipelined tiles, plus the bf16 hidden-activation scratch.
    vmem_bytes = (2 * tb * latent_dim * 4                    # x tile
                  + latent_dim * h1_dim * 2 + h1_dim * 4     # w1 / b1
                  + h1_dim * h2_dim * 2 + h2_dim * 4         # w2 / b2
                  + 2 * (h2_dim * tn * 2 + tn * 4)           # w3 / b3 column tiles
                  + 2 * tb * tn * 4                          # output tile
                  + tb * h2_dim * 2)                         # h2 scratch (bf16)
    vmem_limit = min(64 * 1024 * 1024,
                     max(32 * 1024 * 1024, int(vmem_bytes * 2)))

    out = pl.pallas_call(
        decoder_kernel,
        out_shape=jax.ShapeDtypeStruct((b_pad, out_pad), jnp.float32),
        grid=grid,
        in_specs=[
            pl.BlockSpec((tb, latent_dim), lambda i, j: (i, 0)),   # x batch tile
            _resident_spec((latent_dim, h1_dim)),                  # w1 (bf16, 1-buf)
            _resident_spec((1, h1_dim)),                           # b1 (f32, 1-buf)
            _resident_spec((h1_dim, h2_dim)),                      # w2 (bf16, 1-buf)
            _resident_spec((1, h2_dim)),                           # b2 (f32, 1-buf)
            pl.BlockSpec((h2_dim, tn), lambda i, j: (0, j)),       # w3 column tile
            pl.BlockSpec((1, tn), lambda i, j: (0, j)),            # b3 column tile
        ],
        out_specs=pl.BlockSpec((tb, tn), lambda i, j: (i, j)),
        scratch_shapes=[pltpu.VMEM((tb, h2_dim), jnp.bfloat16)],   # cached fc2 output
        compiler_params=pltpu.CompilerParams(
            dimension_semantics=("parallel", "arbitrary"),
            vmem_limit_bytes=vmem_limit,
        ),
        cost_estimate=pl.CostEstimate(
            flops=flops, transcendentals=0, bytes_accessed=bytes_accessed),
    )(x, w1, b1, w2, b2, w3, b3)

    return out[:B, :out_dim].reshape(B, output_points, 3)


def init_params(key, latent_dim, output_points):
    """Deterministic f32 init mimicking PyTorch nn.Linear default
    (U[-1/sqrt(fan_in), 1/sqrt(fan_in)]).  Weights stored pre-transposed (in, out)."""
    dims = [(latent_dim, 512), (512, 1024), (1024, output_points * 3)]
    params = []
    for (fan_in, fan_out) in dims:
        key, kw, kb = jax.random.split(key, 3)
        bound = 1.0 / jnp.sqrt(float(fan_in))
        w = jax.random.uniform(kw, (fan_in, fan_out), jnp.float32, -bound, bound)
        b = jax.random.uniform(kb, (1, fan_out), jnp.float32, -bound, bound)
        params += [w, b]
    return tuple(params)


def reference_forward(x, prepared_params, output_points):
    """Precision-matched reference: bf16 weights/activations into the matmuls,
    f32 accumulation, f32 bias-add + ReLU."""
    w1, b1, w2, b2, w3, b3 = prepared_params
    out_dim = output_points * 3
    h = jnp.dot(x.astype(jnp.bfloat16), w1, preferred_element_type=jnp.float32) + b1
    h = jnp.maximum(h, 0.0)
    h = jnp.dot(h.astype(jnp.bfloat16), w2, preferred_element_type=jnp.float32) + b2
    h = jnp.maximum(h, 0.0)
    y = jnp.dot(h.astype(jnp.bfloat16), w3, preferred_element_type=jnp.float32) + b3
    return y[:, :out_dim].reshape(-1, output_points, 3)


if __name__ == "__main__":
    latent_dim = 128

    # Case 1: tiny smoke test (single batch tile, single fc3 column tile).
    key = jax.random.PRNGKey(0)
    key, kx = jax.random.split(key)
    output_points = 64
    batch = 2
    x = jax.random.normal(kx, (batch, latent_dim), jnp.float32)
    params = prepare_params(init_params(key, latent_dim, output_points), output_points)
    y = jax.block_until_ready(simple_test_decoder(x, params, output_points))
    y_ref = reference_forward(x, params, output_points)
    assert y.shape == (batch, output_points, 3)
    assert jnp.allclose(y, y_ref, atol=1e-2, rtol=1e-2)

    # Case 2: exercises both grid axes (2 batch tiles x 2 fc3 column tiles),
    # the pl.when(j==0) gating, and the VMEM h2 cache.
    key2 = jax.random.PRNGKey(0)
    key2, kx2 = jax.random.split(key2)
    output_points2 = 1024
    batch2 = 20
    x2 = jax.random.normal(kx2, (batch2, latent_dim), jnp.float32)
    params2 = prepare_params(init_params(key2, latent_dim, output_points2),
                             output_points2)
    y2 = jax.block_until_ready(simple_test_decoder(x2, params2, output_points2))
    y2_ref = reference_forward(x2, params2, output_points2)
    assert y2.shape == (batch2, output_points2, 3)
    assert jnp.allclose(y2, y2_ref, atol=1e-2, rtol=1e-2)

    print("KERNEL_OK")
</pallas_src>

<mosaic_0001>
module attributes {stable_mosaic.version = 11 : i64} {
  func.func @decoder_kernel(%arg0: i32, %arg1: i32, %arg2: memref<8x128xf32, #tpu.memory_space<vmem>>, %arg3: memref<128x512xbf16, #tpu.memory_space<vmem>>, %arg4: memref<1x512xf32, #tpu.memory_space<vmem>>, %arg5: memref<512x1024xbf16, #tpu.memory_space<vmem>>, %arg6: memref<1x1024xf32, #tpu.memory_space<vmem>>, %arg7: memref<1024x256xbf16, #tpu.memory_space<vmem>>, %arg8: memref<1x256xf32, #tpu.memory_space<vmem>>, %arg9: memref<8x256xf32, #tpu.memory_space<vmem>>, %arg10: memref<8x1024xbf16, #tpu.memory_space<vmem>>) attributes {dimension_semantics = [#tpu.dimension_semantics<parallel>, #tpu.dimension_semantics<arbitrary>], iteration_bounds = array<i64: 1, 1>, scalar_prefetch = 0 : i64, scratch_operands = 1 : i64, tpu.core_type = #tpu.core_type<tc>, window_params = [{transform_indices = @transform_0, window_bounds = array<i64: 8, 128>}, {pipeline_mode = #tpu.pipeline_mode<synchronous>, transform_indices = @transform_1, window_bounds = array<i64: 128, 512>}, {pipeline_mode = #tpu.pipeline_mode<synchronous>, transform_indices = @transform_2, window_bounds = array<i64: 1, 512>}, {pipeline_mode = #tpu.pipeline_mode<synchronous>, transform_indices = @transform_3, window_bounds = array<i64: 512, 1024>}, {pipeline_mode = #tpu.pipeline_mode<synchronous>, transform_indices = @transform_4, window_bounds = array<i64: 1, 1024>}, {transform_indices = @transform_5, window_bounds = array<i64: 1024, 256>}, {transform_indices = @transform_6, window_bounds = array<i64: 1, 256>}, {transform_indices = @transform_7, window_bounds = array<i64: 8, 256>}]} {
    %c0_i32 = arith.constant 0 : i32
    %0 = arith.cmpi eq, %arg1, %c0_i32 : i32
    %1 = arith.extui %0 : i1 to i32
    %c0_i32_0 = arith.constant 0 : i32
    %2 = arith.cmpi ne, %1, %c0_i32_0 : i32
    scf.if %2 {
      %c0_8 = arith.constant 0 : index
      %c0_9 = arith.constant 0 : index
      %10 = vector.load %arg2[%c0_8, %c0_9] : memref<8x128xf32, #tpu.memory_space<vmem>>, vector<8x128xf32>
      %11 = arith.truncf %10 : vector<8x128xf32> to vector<8x128xbf16>
      %c0_10 = arith.constant 0 : index
      %c0_11 = arith.constant 0 : index
      %12 = vector.load %arg3[%c0_10, %c0_11] : memref<128x512xbf16, #tpu.memory_space<vmem>>, vector<128x512xbf16>
      %cst_12 = arith.constant dense<0.000000e+00> : vector<8x512xf32>
      %13 = tpu.matmul %11, %12, %cst_12 {dimension_numbers = #tpu.dot_dimension_numbers<[1], [0], [0], [1], [0, 0, 1, 1], [], []>} : vector<8x128xbf16>, vector<128x512xbf16>, vector<8x512xf32> -> vector<8x512xf32>
      %c0_13 = arith.constant 0 : index
      %c0_14 = arith.constant 0 : index
      %14 = vector.load %arg4[%c0_13, %c0_14] : memref<1x512xf32, #tpu.memory_space<vmem>>, vector<1x512xf32>
      %15 = vector.broadcast %14 : vector<1x512xf32> to vector<8x512xf32>
      %16 = arith.addf %13, %15 : vector<8x512xf32>
      %cst_15 = arith.constant 0.000000e+00 : f32
      %17 = vector.broadcast %cst_15 : f32 to vector<8x512xf32>
      %18 = arith.maximumf %16, %17 : vector<8x512xf32>
      %19 = arith.truncf %18 : vector<8x512xf32> to vector<8x512xbf16>
      %c0_16 = arith.constant 0 : index
      %c0_17 = arith.constant 0 : index
      %20 = vector.load %arg5[%c0_16, %c0_17] : memref<512x1024xbf16, #tpu.memory_space<vmem>>, vector<512x1024xbf16>
      %cst_18 = arith.constant dense<0.000000e+00> : vector<8x1024xf32>
      %21 = tpu.matmul %19, %20, %cst_18 {dimension_numbers = #tpu.dot_dimension_numbers<[1], [0], [0], [1], [0, 0, 1, 1], [], []>} : vector<8x512xbf16>, vector<512x1024xbf16>, vector<8x1024xf32> -> vector<8x1024xf32>
      %c0_19 = arith.constant 0 : index
      %c0_20 = arith.constant 0 : index
      %22 = vector.load %arg6[%c0_19, %c0_20] : memref<1x1024xf32, #tpu.memory_space<vmem>>, vector<1x1024xf32>
      %23 = vector.broadcast %22 : vector<1x1024xf32> to vector<8x1024xf32>
      %24 = arith.addf %21, %23 : vector<8x1024xf32>
      %cst_21 = arith.constant 0.000000e+00 : f32
      %25 = vector.broadcast %cst_21 : f32 to vector<8x1024xf32>
      %26 = arith.maximumf %24, %25 : vector<8x1024xf32>
      %27 = arith.truncf %26 : vector<8x1024xf32> to vector<8x1024xbf16>
      %c0_22 = arith.constant 0 : index
      %c0_23 = arith.constant 0 : index
      %28 = vector.load %arg10[%c0_22, %c0_23] : memref<8x1024xbf16, #tpu.memory_space<vmem>>, vector<8x1024xbf16>
      tpu.vector_store %arg10[%c0_22, %c0_23], %27 {strides = array<i32>} : memref<8x1024xbf16, #tpu.memory_space<vmem>>, vector<8x1024xbf16>,
    } else {
    }
    %c0 = arith.constant 0 : index
    %c0_1 = arith.constant 0 : index
    %3 = vector.load %arg10[%c0, %c0_1] : memref<8x1024xbf16, #tpu.memory_space<vmem>>, vector<8x1024xbf16>
    %c0_2 = arith.constant 0 : index
    %c0_3 = arith.constant 0 : index
    %4 = vector.load %arg7[%c0_2, %c0_3] : memref<1024x256xbf16, #tpu.memory_space<vmem>>, vector<1024x256xbf16>
    %cst = arith.constant dense<0.000000e+00> : vector<8x256xf32>
    %5 = tpu.matmul %3, %4, %cst {dimension_numbers = #tpu.dot_dimension_numbers<[1], [0], [0], [1], [0, 0, 1, 1], [], []>} : vector<8x1024xbf16>, vector<1024x256xbf16>, vector<8x256xf32> -> vector<8x256xf32>
    %c0_4 = arith.constant 0 : index
    %c0_5 = arith.constant 0 : index
    %6 = vector.load %arg8[%c0_4, %c0_5] : memref<1x256xf32, #tpu.memory_space<vmem>>, vector<1x256xf32>
    %7 = vector.broadcast %6 : vector<1x256xf32> to vector<8x256xf32>
    %8 = arith.addf %5, %7 : vector<8x256xf32>
    %c0_6 = arith.constant 0 : index
    %c0_7 = arith.constant 0 : index
    %9 = vector.load %arg9[%c0_6, %c0_7] : memref<8x256xf32, #tpu.memory_space<vmem>>, vector<8x256xf32>
    tpu.vector_store %arg9[%c0_6, %c0_7], %8 {strides = array<i32>} : memref<8x256xf32, #tpu.memory_space<vmem>>, vector<8x256xf32>,
    return
  }
  func.func @transform_0(%arg0: i32, %arg1: i32) -> (i32, i32) {
    %c0_i32 = arith.constant 0 : i32
    %c0_i32_0 = arith.constant 0 : i32
    return %arg0, %c0_i32 : i32, i32
  }
  func.func @transform_1(%arg0: i32, %arg1: i32) -> (i32, i32) {
    %c0_i32 = arith.constant 0 : i32
    %c0_i32_0 = arith.constant 0 : i32
    %c0_i32_1 = arith.constant 0 : i32
    return %c0_i32, %c0_i32_0 : i32, i32
  }
  func.func @transform_2(%arg0: i32, %arg1: i32) -> (i32, i32) {
    %c0_i32 = arith.constant 0 : i32
    %c0_i32_0 = arith.constant 0 : i32
    %c0_i32_1 = arith.constant 0 : i32
    return %c0_i32, %c0_i32_0 : i32, i32
  }
  func.func @transform_3(%arg0: i32, %arg1: i32) -> (i32, i32) {
    %c0_i32 = arith.constant 0 : i32
    %c0_i32_0 = arith.constant 0 : i32
    %c0_i32_1 = arith.constant 0 : i32
    return %c0_i32, %c0_i32_0 : i32, i32
  }
  func.func @transform_4(%arg0: i32, %arg1: i32) -> (i32, i32) {
    %c0_i32 = arith.constant 0 : i32
    %c0_i32_0 = arith.constant 0 : i32
    %c0_i32_1 = arith.constant 0 : i32
    return %c0_i32, %c0_i32_0 : i32, i32
  }
  func.func @transform_5(%arg0: i32, %arg1: i32) -> (i32, i32) {
    %c0_i32 = arith.constant 0 : i32
    %c0_i32_0 = arith.constant 0 : i32
    return %c0_i32, %arg1 : i32, i32
  }
  func.func @transform_6(%arg0: i32, %arg1: i32) -> (i32, i32) {
    %c0_i32 = arith.constant 0 : i32
    %c0_i32_0 = arith.constant 0 : i32
    return %c0_i32, %arg1 : i32, i32
  }
  func.func @transform_7(%arg0: i32, %arg1: i32) -> (i32, i32) {
    %c0_i32 = arith.constant 0 : i32
    return %arg0, %arg1 : i32, i32
  }
}

</mosaic_0001>

<llo_original>
// kernel: tpu_custom_call.1
$region0: #{tpu_custom_call.1}
  #allocation0 [shape = 'u32[]', space=smem, size = 0x4, offset = 0x4, fixed_abs, tag = 'smem constant byte address 0x4 - core index']
  #allocation1 [shape = 'u32[72,128]{1,0:T(1,128)}', space=vmem, size = 0x9000, scoped, tag = 'internal scratch']
  #allocation2 [shape = 'bf16[8,1024]{1,0:T(8,128)(2,1)}', space=vmem, size = 0x4000, scoped, tag = 'scratch operand']
  %s0 = inlined_call_operand.hbm [shape: f32[8,128], index: 0, kind: input, shape index: {}]
  %s1 = inlined_call_operand.hbm [shape: bf16[128,512], index: 1, kind: input, shape index: {}]
  %s2 = inlined_call_operand.hbm [shape: f32[1,512], index: 2, kind: input, shape index: {}]
  %s3 = inlined_call_operand.hbm [shape: bf16[512,1024], index: 3, kind: input, shape index: {}]
  %s4 = inlined_call_operand.hbm [shape: f32[1,1024], index: 4, kind: input, shape index: {}]
  %s5 = inlined_call_operand.hbm [shape: bf16[1024,256], index: 5, kind: input, shape index: {}]
  %s6 = inlined_call_operand.vmem [shape: f32[1,256], index: 6, kind: input, shape index: {}]
  %s7 = inlined_call_operand.hbm [shape: f32[8,256], index: 7, kind: output, shape index: {}]
  %s8 = sld [smem:[#allocation0]]
  $region66: #{tpu_custom_call.1} parent=0
    _
  %s10 = ssub.s32 1, %s8
  %s11 = scalar_select 0, %s10, %s8
  $region1: #{tpu_custom_call.1} parent=0
    #allocation3 [shape = 'u8[4096]{0}', space=vmem, size = 0x1000, scoped, tag = 'input window, operand 0, single buffered']
    #allocation4 [shape = 's32[1]{0}', space=sflag, size = 0x4, scoped, tag = 'scoped memory for tpu_custom_call.1']
    #allocation5 [shape = 's32[1]{0}', space=sflag, size = 0x4, scoped, tag = 'scoped memory for tpu_custom_call.1']
    #allocation6 [shape = 'u8[131072]{0}', space=vmem, size = 0x20000, scoped, tag = 'input window, operand 1, single buffered']
    #allocation7 [shape = 's32[1]{0}', space=sflag, size = 0x4, scoped, tag = 'scoped memory for tpu_custom_call.1']
    #allocation8 [shape = 'u8[2048]{0}', space=vmem, size = 0x800, scoped, tag = 'input window, operand 2, single buffered']
    #allocation9 [shape = 'u8[1048576]{0}', space=vmem, size = 0x100000, scoped, tag = 'input window, operand 3, single buffered']
    #allocation10 [shape = 's32[1]{0}', space=sflag, size = 0x4, scoped, tag = 'scoped memory for tpu_custom_call.1']
    #allocation11 [shape = 'u8[4096]{0}', space=vmem, size = 0x1000, scoped, tag = 'input window, operand 4, single buffered']
    #allocation12 [shape = 'u8[524288]{0}', space=vmem, size = 0x80000, scoped, tag = 'input window, operand 5, single buffered']
    #allocation13 [shape = 's32[1]{0}', space=sflag, size = 0x4, scoped, tag = 'scoped memory for tpu_custom_call.1']
    #allocation14 [shape = 'u8[8192]{0}', space=vmem, size = 0x2000, scoped, tag = 'output window, operand 0, single buffered']
    %12 = vsyncpa [#allocation4], 0
    %13 = vsyncpa [#allocation7], 0
    %14 = vsyncpa [#allocation10], 0
    %15 = vsyncpa [#allocation13], 0
    %16 = vsyncpa [#allocation5], 0
    // Predicated region
    $region2: #{tpu_custom_call.1} parent=1 // pred_check
      _
    $region3: #{tpu_custom_call.1} parent=1 // pred_check_branch
      %18 = sbr.rel (0) target = $region5
    $region4: #{tpu_custom_call.1} parent=1 // pred_region
      %20 = vsyncadd [#allocation4], 0
      %s22 = sshll.u32 %s0, 4
      %s23 = int_to_ptr.hbm [resolvable:$true] %s22
      %s24 = sshll.u32 [#allocation3], 4
      %s25 = int_to_ptr.vmem [resolvable:$true] %s24
      %27 = dma.hbm_to_vmem [thread:$0]  %s23, 128, %s25, [#allocation4]
    $region5: #{tpu_custom_call.1} parent=1 // pred_fallthru
      _
    // Predicated region
    $region6: #{tpu_custom_call.1} parent=1 // pred_check
      _
    $region7: #{tpu_custom_call.1} parent=1 // pred_check_branch
      %29 = sbr.rel (0) target = $region9
    $region8: #{tpu_custom_call.1} parent=1 // pred_region
      %31 = vsyncadd [#allocation7], 0
      %s32 = sshll.u32 %s1, 4
      %s33 = int_to_ptr.hbm [resolvable:$true] %s32
      %s34 = sshll.u32 [#allocation6], 4
      %s35 = int_to_ptr.vmem [resolvable:$true] %s34
      %40 = dma.hbm_to_vmem [thread:$0]  %s33, 4096, %s35, [#allocation7], 256, 256, 16
    $region9: #{tpu_custom_call.1} parent=1 // pred_fallthru
      _
    // Predicated region
    $region10: #{tpu_custom_call.1} parent=1 // pred_check
      _
    $region11: #{tpu_custom_call.1} parent=1 // pred_check_branch
      %42 = sbr.rel (0) target = $region13
    $region12: #{tpu_custom_call.1} parent=1 // pred_region
      %44 = vsyncadd [#allocation7], 0
      %s46 = sshll.u32 %s2, 4
      %s47 = int_to_ptr.hbm [resolvable:$true] %s46
      %s48 = sshll.u32 [#allocation8], 4
      %s49 = int_to_ptr.vmem [resolvable:$true] %s48
      %51 = dma.hbm_to_vmem [thread:$0]  %s47, 64, %s49, [#allocation7]
    $region13: #{tpu_custom_call.1} parent=1 // pred_fallthru
      _
    // Predicated region
    $region14: #{tpu_custom_call.1} parent=1 // pred_check
      _
    $region15: #{tpu_custom_call.1} parent=1 // pred_check_branch
      %53 = sbr.rel (0) target = $region17
    $region16: #{tpu_custom_call.1} parent=1 // pred_region
      %55 = vsyncadd [#allocation10], 0
      %s56 = sshll.u32 %s3, 4
      %s57 = int_to_ptr.hbm [resolvable:$true] %s56
      %s58 = sshll.u32 [#allocation9], 4
      %s59 = int_to_ptr.vmem [resolvable:$true] %s58
      %64 = dma.hbm_to_vmem [thread:$0]  %s57, 32768, %s59, [#allocation10], 512, 512, 32
    $region17: #{tpu_custom_call.1} parent=1 // pred_fallthru
      _
    // Predicated region
    $region18: #{tpu_custom_call.1} parent=1 // pred_check
      _
    $region19: #{tpu_custom_call.1} parent=1 // pred_check_branch
      %66 = sbr.rel (0) target = $region21
    $region20: #{tpu_custom_call.1} parent=1 // pred_region
      %68 = vsyncadd [#allocation10], 0
      %s70 = sshll.u32 %s4, 4
      %s71 = int_to_ptr.hbm [resolvable:$true] %s70
      %s72 = sshll.u32 [#allocation11], 4
      %s73 = int_to_ptr.vmem [resolvable:$true] %s72
      %75 = dma.hbm_to_vmem [thread:$0]  %s71, 128, %s73, [#allocation10]
    $region21: #{tpu_custom_call.1} parent=1 // pred_fallthru
      _
    // Predicated region
    $region22: #{tpu_custom_call.1} parent=1 // pred_check
      _
    $region23: #{tpu_custom_call.1} parent=1 // pred_check_branch
      %77 = sbr.rel (0) target = $region25
    $region24: #{tpu_custom_call.1} parent=1 // pred_region
      %79 = vsyncadd [#allocation13], 0
      %s80 = sshll.u32 %s5, 4
      %s81 = int_to_ptr.hbm [resolvable:$true] %s80
      %s82 = sshll.u32 [#allocation12], 4
      %s83 = int_to_ptr.vmem [resolvable:$true] %s82
      %88 = dma.hbm_to_vmem [thread:$0]  %s81, 16384, %s83, [#allocation13], 128, 128, 8
    $region25: #{tpu_custom_call.1} parent=1 // pred_fallthru
      _
    // Predicated region
    $region26: #{tpu_custom_call.1} parent=1 // pred_check
      _
    $region27: #{tpu_custom_call.1} parent=1 // pred_check_branch
      %90 = sbr.rel (0) target = $region29
    $region28: #{tpu_custom_call.1} parent=1 // pred_region
      _
    $region29: #{tpu_custom_call.1} parent=1 // pred_fallthru
      _
    // Predicated region
    $region30: #{tpu_custom_call.1} parent=1 // pred_check
      _
    $region31: #{tpu_custom_call.1} parent=1 // pred_check_branch
      %92 = sbr.rel (0) target = $region33
    $region32: #{tpu_custom_call.1} parent=1 // pred_region
      %94 = dma.done [#allocation4], 128
    $region33: #{tpu_custom_call.1} parent=1 // pred_fallthru
      _
    // Predicated region
    $region34: #{tpu_custom_call.1} parent=1 // pred_check
      _
    $region35: #{tpu_custom_call.1} parent=1 // pred_check_branch
      %96 = sbr.rel (0) target = $region37
    $region36: #{tpu_custom_call.1} parent=1 // pred_region
      %98 = dma.done [#allocation7], 4096
    $region37: #{tpu_custom_call.1} parent=1 // pred_fallthru
      _
    // Predicated region
    $region38: #{tpu_custom_call.1} parent=1 // pred_check
      _
    $region39: #{tpu_custom_call.1} parent=1 // pred_check_branch
      %100 = sbr.rel (0) target = $region41
    $region40: #{tpu_custom_call.1} parent=1 // pred_region
      %102 = dma.done [#allocation7], 64
    $region41: #{tpu_custom_call.1} parent=1 // pred_fallthru
      _
    // Predicated region
    $region42: #{tpu_custom_call.1} parent=1 // pred_check
      _
    $region43: #{tpu_custom_call.1} parent=1 // pred_check_branch
      %104 = sbr.rel (0) target = $region45
    $region44: #{tpu_custom_call.1} parent=1 // pred_region
      %106 = dma.done [#allocation10], 32768
    $region45: #{tpu_custom_call.1} parent=1 // pred_fallthru
      _
    // Predicated region
    $region46: #{tpu_custom_call.1} parent=1 // pred_check
      _
    $region47: #{tpu_custom_call.1} parent=1 // pred_check_branch
      %108 = sbr.rel (0) target = $region49
    $region48: #{tpu_custom_call.1} parent=1 // pred_region
      %110 = dma.done [#allocation10], 128
    $region49: #{tpu_custom_call.1} parent=1 // pred_fallthru
      _
    // Predicated region
    $region50: #{tpu_custom_call.1} parent=1 // pred_check
      _
    $region51: #{tpu_custom_call.1} parent=1 // pred_check_branch
      %112 = sbr.rel (0) target = $region53
    $region52: #{tpu_custom_call.1} parent=1 // pred_region
      %114 = dma.done [#allocation13], 16384
    $region53: #{tpu_custom_call.1} parent=1 // pred_fallthru
      _
    %p115 = scmp.eq.s32.totalorder 0, 0
    // Predicated region
    $region54: #{tpu_custom_call.1} parent=1 // pred_check
      %p116 = pneg %p115
    $region55: #{tpu_custom_call.1} parent=1 // pred_check_branch
      %118 = sbr.rel (%p116) target = $region57
    $region56: #{tpu_custom_call.1} parent=1 // pred_region
      %v119 = vld [vmem:[#allocation3] sm:$0xff]
      %v120 = vpack.c.bf16 %v119, %v119
      %v121 = vld [vmem:[#allocation6] sm:$0xff]
      %v122 = vld [vmem:[#allocation6 + $0x8] sm:$0xff]
      %v123 = vld [vmem:[#allocation6 + $0x10] sm:$0xff]
      %v124 = vld [vmem:[#allocation6 + $0x18] sm:$0xff]
      %v125 = vld [vmem:[#allocation6 + $0x20] sm:$0xff]
      %v126 = vld [vmem:[#allocation6 + $0x28] sm:$0xff]
      %v127 = vld [vmem:[#allocation6 + $0x30] sm:$0xff]
      %v128 = vld [vmem:[#allocation6 + $0x38] sm:$0xff]
      %v129 = vld [vmem:[#allocation6 + $0x40] sm:$0xff]
      %v130 = vld [vmem:[#allocation6 + $0x48] sm:$0xff]
      %v131 = vld [vmem:[#allocation6 + $0x50] sm:$0xff]
      %v132 = vld [vmem:[#allocation6 + $0x58] sm:$0xff]
      %v133 = vld [vmem:[#allocation6 + $0x60] sm:$0xff]
      %v134 = vld [vmem:[#allocation6 + $0x68] sm:$0xff]
      %v135 = vld [vmem:[#allocation6 + $0x70] sm:$0xff]
      %v136 = vld [vmem:[#allocation6 + $0x78] sm:$0xff]
      %v137 = vld [vmem:[#allocation6 + $0x80] sm:$0xff]
      %v138 = vld [vmem:[#allocation6 + $0x88] sm:$0xff]
      %v139 = vld [vmem:[#allocation6 + $0x90] sm:$0xff]
      %v140 = vld [vmem:[#allocation6 + $0x98] sm:$0xff]
      %v141 = vld [vmem:[#allocation6 + $0xa0] sm:$0xff]
      %v142 = vld [vmem:[#allocation6 + $0xa8] sm:$0xff]
      %v143 = vld [vmem:[#allocation6 + $0xb0] sm:$0xff]
      %v144 = vld [vmem:[#allocation6 + $0xb8] sm:$0xff]
      %v145 = vld [vmem:[#allocation6 + $0xc0] sm:$0xff]
      %v146 = vld [vmem:[#allocation6 + $0xc8] sm:$0xff]
      %v147 = vld [vmem:[#allocation6 + $0xd0] sm:$0xff]
      %v148 = vld [vmem:[#allocation6 + $0xd8] sm:$0xff]
      %v149 = vld [vmem:[#allocation6 + $0xe0] sm:$0xff]
      %v150 = vld [vmem:[#allocation6 + $0xe8] sm:$0xff]
      %v151 = vld [vmem:[#allocation6 + $0xf0] sm:$0xff]
      %v152 = vld [vmem:[#allocation6 + $0xf8] sm:$0xff]
      %v153 = vld [vmem:[#allocation8] sm:$0xf]
      %v155 = vperm.slane %v153, 0
      %v156 = vperm.slane %v153, 1
      %v157 = vperm.slane %v153, 2
      %v158 = vperm.slane %v153, 3
      %v195 = vunpack.c.l.b16 %v121
      %v196 = vunpack.c.h.b16 %v121
      %v197 = vunpack.c.l.b16 %v122
      %v198 = vunpack.c.h.b16 %v122
      %v199 = vunpack.c.l.b16 %v123
      %v200 = vunpack.c.h.b16 %v123
      %v201 = vunpack.c.l.b16 %v124
      %v202 = vunpack.c.h.b16 %v124
      %v203 = vunpack.c.l.b16 %v125
      %v204 = vunpack.c.h.b16 %v125
      %v205 = vunpack.c.l.b16 %v126
      %v206 = vunpack.c.h.b16 %v126
      %v207 = vunpack.c.l.b16 %v127
      %v208 = vunpack.c.h.b16 %v127
      %v209 = vunpack.c.l.b16 %v128
      %v210 = vunpack.c.h.b16 %v128
      %v211 = vunpack.c.l.b16 %v129
      %v212 = vunpack.c.h.b16 %v129
      %v213 = vunpack.c.l.b16 %v130
      %v214 = vunpack.c.h.b16 %v130
      %v215 = vunpack.c.l.b16 %v131
      %v216 = vunpack.c.h.b16 %v131
      %v217 = vunpack.c.l.b16 %v132
      %v218 = vunpack.c.h.b16 %v132
      %v219 = vunpack.c.l.b16 %v133
      %v220 = vunpack.c.h.b16 %v133
      %v221 = vunpack.c.l.b16 %v134
      %v222 = vunpack.c.h.b16 %v134
      %v223 = vunpack.c.l.b16 %v135
      %v224 = vunpack.c.h.b16 %v135
      %v225 = vunpack.c.l.b16 %v136
      %v226 = vunpack.c.h.b16 %v136
      %v227 = vunpack.c.l.b16 %v137
      %v228 = vunpack.c.h.b16 %v137
      %v229 = vunpack.c.l.b16 %v138
      %v230 = vunpack.c.h.b16 %v138
      %v231 = vunpack.c.l.b16 %v139
      %v232 = vunpack.c.h.b16 %v139
      %v233 = vunpack.c.l.b16 %v140
      %v234 = vunpack.c.h.b16 %v140
      %v235 = vunpack.c.l.b16 %v141
      %v236 = vunpack.c.h.b16 %v141
      %v237 = vunpack.c.l.b16 %v142
      %v238 = vunpack.c.h.b16 %v142
      %v239 = vunpack.c.l.b16 %v143
      %v240 = vunpack.c.h.b16 %v143
      %v241 = vunpack.c.l.b16 %v144
      %v242 = vunpack.c.h.b16 %v144
      %v243 = vunpack.c.l.b16 %v145
      %v244 = vunpack.c.h.b16 %v145
      %v245 = vunpack.c.l.b16 %v146
      %v246 = vunpack.c.h.b16 %v146
      %v247 = vunpack.c.l.b16 %v147
      %v248 = vunpack.c.h.b16 %v147
      %v249 = vunpack.c.l.b16 %v148
      %v250 = vunpack.c.h.b16 %v148
      %v251 = vunpack.c.l.b16 %v149
      %v252 = vunpack.c.h.b16 %v149
      %v253 = vunpack.c.l.b16 %v150
      %v254 = vunpack.c.h.b16 %v150
      %v255 = vunpack.c.l.b16 %v151
      %v256 = vunpack.c.h.b16 %v151
      %v257 = vunpack.c.l.b16 %v152
      %v258 = vunpack.c.h.b16 %v152
      %v259 = vpack.c.b16 %v199, %v195
      %v260 = vpack.c.b16 %v200, %v196
      %v261 = vpack.c.b16 %v201, %v197
      %v262 = vpack.c.b16 %v202, %v198
      %v263 = vpack.c.b16 %v207, %v203
      %v264 = vpack.c.b16 %v208, %v204
      %v265 = vpack.c.b16 %v209, %v205
      %v266 = vpack.c.b16 %v210, %v206
      %v267 = vpack.c.b16 %v215, %v211
      %v268 = vpack.c.b16 %v216, %v212
      %v269 = vpack.c.b16 %v217, %v213
      %v270 = vpack.c.b16 %v218, %v214
      %v271 = vpack.c.b16 %v223, %v219
      %v272 = vpack.c.b16 %v224, %v220
      %v273 = vpack.c.b16 %v225, %v221
      %v274 = vpack.c.b16 %v226, %v222
      %v275 = vpack.c.b16 %v231, %v227
      %v276 = vpack.c.b16 %v232, %v228
      %v277 = vpack.c.b16 %v233, %v229
      %v278 = vpack.c.b16 %v234, %v230
      %v279 = vpack.c.b16 %v239, %v235
      %v280 = vpack.c.b16 %v240, %v236
      %v281 = vpack.c.b16 %v241, %v237
      %v282 = vpack.c.b16 %v242, %v238
      %v283 = vpack.c.b16 %v247, %v243
      %v284 = vpack.c.b16 %v248, %v244
      %v285 = vpack.c.b16 %v249, %v245
      %v286 = vpack.c.b16 %v250, %v246
      %v287 = vpack.c.b16 %v255, %v251
      %v288 = vpack.c.b16 %v256, %v252
      %v289 = vpack.c.b16 %v257, %v253
      %v290 = vpack.c.b16 %v258, %v254
      %323 = vmatpush.bf16.msra.mxu0 %v287
      %324 = vmatpush.bf16.msra.mxu0 %v283
      %325 = vmatpush.bf16.msra.mxu0 %v279
      %326 = vmatpush.bf16.msra.mxu0 %v275
      %327 = vmatpush.bf16.msra.mxu0 %v271
      %328 = vmatpush.bf16.msra.mxu0 %v267
      %329 = vmatpush.bf16.msra.mxu0 %v263
      %330 = vmatpush.bf16.msra.mxu0 %v259
      %331 = vmatmul.bf16.gmra.mxu0 %v120
      %v332 = vpop.f32.mrf.mxu0
      %v333 = vadd.f32 %v155, %v332
      %v334 = vpop.f32.mrf.mxu0
      %335 = vdwg.mxu0
      %336 = vmatpush.bf16.msra.mxu0 %v288
      %337 = vmatpush.bf16.msra.mxu0 %v284
      %338 = vmatpush.bf16.msra.mxu0 %v280
      %339 = vmatpush.bf16.msra.mxu0 %v276
      %340 = vmatpush.bf16.msra.mxu0 %v272
      %341 = vmatpush.bf16.msra.mxu0 %v268
      %342 = vmatpush.bf16.msra.mxu0 %v264
      %343 = vmatpush.bf16.msra.mxu0 %v260
      %344 = vmatmul.bf16.gmra.mxu0 %v120
      %v345 = vpop.f32.mrf.mxu0
      %v346 = vadd.f32 %v156, %v345
      %v347 = vpop.f32.mrf.mxu0
      %348 = vdwg.mxu0
      %349 = vmatpush.bf16.msra.mxu0 %v289
      %350 = vmatpush.bf16.msra.mxu0 %v285
      %351 = vmatpush.bf16.msra.mxu0 %v281
      %352 = vmatpush.bf16.msra.mxu0 %v277
      %353 = vmatpush.bf16.msra.mxu0 %v273
      %354 = vmatpush.bf16.msra.mxu0 %v269
      %355 = vmatpush.bf16.msra.mxu0 %v265
      %356 = vmatpush.bf16.msra.mxu0 %v261
      %357 = vmatmul.bf16.gmra.mxu0 %v120
      %v358 = vpop.f32.mrf.mxu0
      %v359 = vadd.f32 %v157, %v358
      %v360 = vpop.f32.mrf.mxu0
      %361 = vdwg.mxu0
      %362 = vmatpush.bf16.msra.mxu0 %v290
      %363 = vmatpush.bf16.msra.mxu0 %v286
      %364 = vmatpush.bf16.msra.mxu0 %v282
      %365 = vmatpush.bf16.msra.mxu0 %v278
      %366 = vmatpush.bf16.msra.mxu0 %v274
      %367 = vmatpush.bf16.msra.mxu0 %v270
      %368 = vmatpush.bf16.msra.mxu0 %v266
      %369 = vmatpush.bf16.msra.mxu0 %v262
      %370 = vmatmul.bf16.gmra.mxu0 %v120
      %v371 = vpop.f32.mrf.mxu0
      %v372 = vadd.f32 %v158, %v371
      %v373 = vpop.f32.mrf.mxu0
      %374 = vdwg.mxu0
      %v375 = vmax.f32 %v333, 0.0
      %v376 = vmax.f32 %v346, 0.0
      %v377 = vmax.f32 %v359, 0.0
      %v378 = vmax.f32 %v372, 0.0
      %v379 = vpack.c.bf16 %v375, %v375
      %v380 = vpack.c.bf16 %v376, %v376
      %v381 = vpack.c.bf16 %v377, %v377
      %v382 = vpack.c.bf16 %v378, %v378
      %v383 = vld [vmem:[#allocation9] sm:$0xff]
      %v384 = vld [vmem:[#allocation9 + $0x8] sm:$0xff]
      %v385 = vld [vmem:[#allocation9 + $0x10] sm:$0xff]
      %v386 = vld [vmem:[#allocation9 + $0x18] sm:$0xff]
      %v387 = vld [vmem:[#allocation9 + $0x20] sm:$0xff]
      %v388 = vld [vmem:[#allocation9 + $0x28] sm:$0xff]
      %v389 = vld [vmem:[#allocation9 + $0x30] sm:$0xff]
      %v390 = vld [vmem:[#allocation9 + $0x38] sm:$0xff]
      %v391 = vld [vmem:[#allocation9 + $0x40] sm:$0xff]
      %v392 = vld [vmem:[#allocation9 + $0x48] sm:$0xff]
      %v393 = vld [vmem:[#allocation9 + $0x50] sm:$0xff]
      %v394 = vld [vmem:[#allocation9 + $0x58] sm:$0xff]
      %v395 = vld [vmem:[#allocation9 + $0x60] sm:$0xff]
      %v396 = vld [vmem:[#allocation9 + $0x68] sm:$0xff]
      %v397 = vld [vmem:[#allocation9 + $0x70] sm:$0xff]
      %v398 = vld [vmem:[#allocation9 + $0x78] sm:$0xff]
      %v399 = vld [vmem:[#allocation9 + $0x80] sm:$0xff]
      %v400 = vld [vmem:[#allocation9 + $0x88] sm:$0xff]
      %v401 = vld [vmem:[#allocation9 + $0x90] sm:$0xff]
      %v402 = vld [vmem:[#allocation9 + $0x98] sm:$0xff]
      %v403 = vld [vmem:[#allocation9 + $0xa0] sm:$0xff]
      %v404 = vld [vmem:[#allocation9 + $0xa8] sm:$0xff]
      %v405 = vld [vmem:[#allocation9 + $0xb0] sm:$0xff]
      %v406 = vld [vmem:[#allocation9 + $0xb8] sm:$0xff]
      %v407 = vld [vmem:[#allocation9 + $0xc0] sm:$0xff]
      %v408 = vld [vmem:[#allocation9 + $0xc8] sm:$0xff]
      %v409 = vld [vmem:[#allocation9 + $0xd0] sm:$0xff]
      %v410 = vld [vmem:[#allocation9 + $0xd8] sm:$0xff]
      %v411 = vld [vmem:[#allocation9 + $0xe0] sm:$0xff]
      %v412 = vld [vmem:[#allocation9 + $0xe8] sm:$0xff]
      %v413 = vld [vmem:[#allocation9 + $0xf0] sm:$0xff]
      %v414 = vld [vmem:[#allocation9 + $0xf8] sm:$0xff]
      %v415 = vld [vmem:[#allocation9 + $0x100] sm:$0xff]
      %v416 = vld [vmem:[#allocation9 + $0x108] sm:$0xff]
      %v417 = vld [vmem:[#allocation9 + $0x110] sm:$0xff]
      %v418 = vld [vmem:[#allocation9 + $0x118] sm:$0xff]
      %v419 = vld [vmem:[#allocation9 + $0x120] sm:$0xff]
      %v420 = vld [vmem:[#allocation9 + $0x128] sm:$0xff]
      %v421 = vld [vmem:[#allocation9 + $0x130] sm:$0xff]
      %v422 = vld [vmem:[#allocation9 + $0x138] sm:$0xff]
      %v423 = vld [vmem:[#allocation9 + $0x140] sm:$0xff]
      %v424 = vld [vmem:[#allocation9 + $0x148] sm:$0xff]
      %v425 = vld [vmem:[#allocation9 + $0x150] sm:$0xff]
      %v426 = vld [vmem:[#allocation9 + $0x158] sm:$0xff]
      %v427 = vld [vmem:[#allocation9 + $0x160] sm:$0xff]
      %v428 = vld [vmem:[#allocation9 + $0x168] sm:$0xff]
      %v429 = vld [vmem:[#allocation9 + $0x170] sm:$0xff]
      %v430 = vld [vmem:[#allocation9 + $0x178] sm:$0xff]
      %v431 = vld [vmem:[#allocation9 + $0x180] sm:$0xff]
      %v432 = vld [vmem:[#allocation9 + $0x188] sm:$0xff]
      %v433 = vld [vmem:[#allocation9 + $0x190] sm:$0xff]
      %v434 = vld [vmem:[#allocation9 + $0x198] sm:$0xff]
      %v435 = vld [vmem:[#allocation9 + $0x1a0] sm:$0xff]
      %v436 = vld [vmem:[#allocation9 + $0x1a8] sm:$0xff]
      %v437 = vld [vmem:[#allocation9 + $0x1b0] sm:$0xff]
      %v438 = vld [vmem:[#allocation9 + $0x1b8] sm:$0xff]
      %v439 = vld [vmem:[#allocation9 + $0x1c0] sm:$0xff]
      %v440 = vld [vmem:[#allocation9 + $0x1c8] sm:$0xff]
      %v441 = vld [vmem:[#allocation9 + $0x1d0] sm:$0xff]
      %v442 = vld [vmem:[#allocation9 + $0x1d8] sm:$0xff]
      %v443 = vld [vmem:[#allocation9 + $0x1e0] sm:$0xff]
      %v444 = vld [vmem:[#allocation9 + $0x1e8] sm:$0xff]
      %v445 = vld [vmem:[#allocation9 + $0x1f0] sm:$0xff]
      %v446 = vld [vmem:[#allocation9 + $0x1f8] sm:$0xff]
      %v447 = vld [vmem:[#allocation9 + $0x200] sm:$0xff]
      %v448 = vld [vmem:[#allocation9 + $0x208] sm:$0xff]
      %v449 = vld [vmem:[#allocation9 + $0x210] sm:$0xff]
      %v450 = vld [vmem:[#allocation9 + $0x218] sm:$0xff]
      %v451 = vld [vmem:[#allocation9 + $0x220] sm:$0xff]
      %v452 = vld [vmem:[#allocation9 + $0x228] sm:$0xff]
      %v453 = vld [vmem:[#allocation9 + $0x230] sm:$0xff]
      %v454 = vld [vmem:[#allocation9 + $0x238] sm:$0xff]
      %v455 = vld [vmem:[#allocation9 + $0x240] sm:$0xff]
      %v456 = vld [vmem:[#allocation9 + $0x248] sm:$0xff]
      %v457 = vld [vmem:[#allocation9 + $0x250] sm:$0xff]
      %v458 = vld [vmem:[#allocation9 + $0x258] sm:$0xff]
      %v459 = vld [vmem:[#allocation9 + $0x260] sm:$0xff]
      %v460 = vld [vmem:[#allocation9 + $0x268] sm:$0xff]
      %v461 = vld [vmem:[#allocation9 + $0x270] sm:$0xff]
      %v462 = vld [vmem:[#allocation9 + $0x278] sm:$0xff]
      %v463 = vld [vmem:[#allocation9 + $0x280] sm:$0xff]
      %v464 = vld [vmem:[#allocation9 + $0x288] sm:$0xff]
      %v465 = vld [vmem:[#allocation9 + $0x290] sm:$0xff]
      %v466 = vld [vmem:[#allocation9 + $0x298] sm:$0xff]
      %v467 = vld [vmem:[#allocation9 + $0x2a0] sm:$0xff]
      %v468 = vld [vmem:[#allocation9 + $0x2a8] sm:$0xff]
      %v469 = vld [vmem:[#allocation9 + $0x2b0] sm:$0xff]
      %v470 = vld [vmem:[#allocation9 + $0x2b8] sm:$0xff]
      %v471 = vld [vmem:[#allocation9 + $0x2c0] sm:$0xff]
      %v472 = vld [vmem:[#allocation9 + $0x2c8] sm:$0xff]
      %v473 = vld [vmem:[#allocation9 + $0x2d0] sm:$0xff]
      %v474 = vld [vmem:[#allocation9 + $0x2d8] sm:$0xff]
      %v475 = vld [vmem:[#allocation9 + $0x2e0] sm:$0xff]
      %v476 = vld [vmem:[#allocation9 + $0x2e8] sm:$0xff]
      %v477 = vld [vmem:[#allocation9 + $0x2f0] sm:$0xff]
      %v478 = vld [vmem:[#allocation9 + $0x2f8] sm:$0xff]
      %v479 = vld [vmem:[#allocation9 + $0x300] sm:$0xff]
      %v480 = vld [vmem:[#allocation9 + $0x308] sm:$0xff]
      %v481 = vld [vmem:[#allocation9 + $0x310] sm:$0xff]
      %v482 = vld [vmem:[#allocation9 + $0x318] sm:$0xff]
      %v483 = vld [vmem:[#allocation9 + $0x320] sm:$0xff]
      %v484 = vld [vmem:[#allocation9 + $0x328] sm:$0xff]
      %v485 = vld [vmem:[#allocation9 + $0x330] sm:$0xff]
      %v486 = vld [vmem:[#allocation9 + $0x338] sm:$0xff]
      %v487 = vld [vmem:[#allocation9 + $0x340] sm:$0xff]
      %v488 = vld [vmem:[#allocation9 + $0x348] sm:$0xff]
      %v489 = vld [vmem:[#allocation9 + $0x350] sm:$0xff]
      %v490 = vld [vmem:[#allocation9 + $0x358] sm:$0xff]
      %v491 = vld [vmem:[#allocation9 + $0x360] sm:$0xff]
      %v492 = vld [vmem:[#allocation9 + $0x368] sm:$0xff]
      %v493 = vld [vmem:[#allocation9 + $0x370] sm:$0xff]
      %v494 = vld [vmem:[#allocation9 + $0x378] sm:$0xff]
      %v495 = vld [vmem:[#allocation9 + $0x380] sm:$0xff]
      %v496 = vld [vmem:[#allocation9 + $0x388] sm:$0xff]
      %v497 = vld [vmem:[#allocation9 + $0x390] sm:$0xff]
      %v498 = vld [vmem:[#allocation9 + $0x398] sm:$0xff]
      %v499 = vld [vmem:[#allocation9 + $0x3a0] sm:$0xff]
      %v500 = vld [vmem:[#allocation9 + $0x3a8] sm:$0xff]
      %v501 = vld [vmem:[#allocation9 + $0x3b0] sm:$0xff]
      %v502 = vld [vmem:[#allocation9 + $0x3b8] sm:$0xff]
      %v503 = vld [vmem:[#allocation9 + $0x3c0] sm:$0xff]
      %v504 = vld [vmem:[#allocation9 + $0x3c8] sm:$0xff]
      %v505 = vld [vmem:[#allocation9 + $0x3d0] sm:$0xff]
      %v506 = vld [vmem:[#allocation9 + $0x3d8] sm:$0xff]
      %v507 = vld [vmem:[#allocation9 + $0x3e0] sm:$0xff]
      %v508 = vld [vmem:[#allocation9 + $0x3e8] sm:$0xff]
      %v509 = vld [vmem:[#allocation9 + $0x3f0] sm:$0xff]
      %v510 = vld [vmem:[#allocation9 + $0x3f8] sm:$0xff]
      %v511 = vld [vmem:[#allocation9 + $0x400] sm:$0xff]
      %v512 = vld [vmem:[#allocation9 + $0x408] sm:$0xff]
      %v513 = vld [vmem:[#allocation9 + $0x410] sm:$0xff]
      %v514 = vld [vmem:[#allocation9 + $0x418] sm:$0xff]
      %v515 = vld [vmem:[#allocation9 + $0x420] sm:$0xff]
      %v516 = vld [vmem:[#allocation9 + $0x428] sm:$0xff]
      %v517 = vld [vmem:[#allocation9 + $0x430] sm:$0xff]
      %v518 = vld [vmem:[#allocation9 + $0x438] sm:$0xff]
      %v519 = vld [vmem:[#allocation9 + $0x440] sm:$0xff]
      %v520 = vld [vmem:[#allocation9 + $0x448] sm:$0xff]
      %v521 = vld [vmem:[#allocation9 + $0x450] sm:$0xff]
      %v522 = vld [vmem:[#allocation9 + $0x458] sm:$0xff]
      %v523 = vld [vmem:[#allocation9 + $0x460] sm:$0xff]
      %v524 = vld [vmem:[#allocation9 + $0x468] sm:$0xff]
      %v525 = vld [vmem:[#allocation9 + $0x470] sm:$0xff]
      %v526 = vld [vmem:[#allocation9 + $0x478] sm:$0xff]
      %v527 = vld [vmem:[#allocation9 + $0x480] sm:$0xff]
      %v528 = vld [vmem:[#allocation9 + $0x488] sm:$0xff]
      %v529 = vld [vmem:[#allocation9 + $0x490] sm:$0xff]
      %v530 = vld [vmem:[#allocation9 + $0x498] sm:$0xff]
      %v531 = vld [vmem:[#allocation9 + $0x4a0] sm:$0xff]
      %v532 = vld [vmem:[#allocation9 + $0x4a8] sm:$0xff]
      %v533 = vld [vmem:[#allocation9 + $0x4b0] sm:$0xff]
      %v534 = vld [vmem:[#allocation9 + $0x4b8] sm:$0xff]
      %v535 = vld [vmem:[#allocation9 + $0x4c0] sm:$0xff]
      %v536 = vld [vmem:[#allocation9 + $0x4c8] sm:$0xff]
      %v537 = vld [vmem:[#allocation9 + $0x4d0] sm:$0xff]
      %v538 = vld [vmem:[#allocation9 + $0x4d8] sm:$0xff]
      %v539 = vld [vmem:[#allocation9 + $0x4e0] sm:$0xff]
      %v540 = vld [vmem:[#allocation9 + $0x4e8] sm:$0xff]
      %v541 = vld [vmem:[#allocation9 + $0x4f0] sm:$0xff]
      %v542 = vld [vmem:[#allocation9 + $0x4f8] sm:$0xff]
      %v543 = vld [vmem:[#allocation9 + $0x500] sm:$0xff]
      %v544 = vld [vmem:[#allocation9 + $0x508] sm:$0xff]
      %v545 = vld [vmem:[#allocation9 + $0x510] sm:$0xff]
      %v546 = vld [vmem:[#allocation9 + $0x518] sm:$0xff]
      %v547 = vld [vmem:[#allocation9 + $0x520] sm:$0xff]
      %v548 = vld [vmem:[#allocation9 + $0x528] sm:$0xff]
      %v549 = vld [vmem:[#allocation9 + $0x530] sm:$0xff]
      %v550 = vld [vmem:[#allocation9 + $0x538] sm:$0xff]
      %v551 = vld [vmem:[#allocation9 + $0x540] sm:$0xff]
      %v552 = vld [vmem:[#allocation9 + $0x548] sm:$0xff]
      %v553 = vld [vmem:[#allocation9 + $0x550] sm:$0xff]
      %v554 = vld [vmem:[#allocation9 + $0x558] sm:$0xff]
      %v555 = vld [vmem:[#allocation9 + $0x560] sm:$0xff]
      %v556 = vld [vmem:[#allocation9 + $0x568] sm:$0xff]
      %v557 = vld [vmem:[#allocation9 + $0x570] sm:$0xff]
      %v558 = vld [vmem:[#allocation9 + $0x578] sm:$0xff]
      %v559 = vld [vmem:[#allocation9 + $0x580] sm:$0xff]
      %v560 = vld [vmem:[#allocation9 + $0x588] sm:$0xff]
      %v561 = vld [vmem:[#allocation9 + $0x590] sm:$0xff]
      %v562 = vld [vmem:[#allocation9 + $0x598] sm:$0xff]
      %v563 = vld [vmem:[#allocation9 + $0x5a0] sm:$0xff]
      %v564 = vld [vmem:[#allocation9 + $0x5a8] sm:$0xff]
      %v565 = vld [vmem:[#allocation9 + $0x5b0] sm:$0xff]
      %v566 = vld [vmem:[#allocation9 + $0x5b8] sm:$0xff]
      %v567 = vld [vmem:[#allocation9 + $0x5c0] sm:$0xff]
      %v568 = vld [vmem:[#allocation9 + $0x5c8] sm:$0xff]
      %v569 = vld [vmem:[#allocation9 + $0x5d0] sm:$0xff]
      %v570 = vld [vmem:[#allocation9 + $0x5d8] sm:$0xff]
      %v571 = vld [vmem:[#allocation9 + $0x5e0] sm:$0xff]
      %v572 = vld [vmem:[#allocation9 + $0x5e8] sm:$0xff]
      %v573 = vld [vmem:[#allocation9 + $0x5f0] sm:$0xff]
      %v574 = vld [vmem:[#allocation9 + $0x5f8] sm:$0xff]
      %v575 = vld [vmem:[#allocation9 + $0x600] sm:$0xff]
      %v576 = vld [vmem:[#allocation9 + $0x608] sm:$0xff]
      %v577 = vld [vmem:[#allocation9 + $0x610] sm:$0xff]
      %v578 = vld [vmem:[#allocation9 + $0x618] sm:$0xff]
      %v579 = vld [vmem:[#allocation9 + $0x620] sm:$0xff]
      %v580 = vld [vmem:[#allocation9 + $0x628] sm:$0xff]
      %v581 = vld [vmem:[#allocation9 + $0x630] sm:$0xff]
      %v582 = vld [vmem:[#allocation9 + $0x638] sm:$0xff]
      %v583 = vld [vmem:[#allocation9 + $0x640] sm:$0xff]
      %v584 = vld [vmem:[#allocation9 + $0x648] sm:$0xff]
      %v585 = vld [vmem:[#allocation9 + $0x650] sm:$0xff]
      %v586 = vld [vmem:[#allocation9 + $0x658] sm:$0xff]
      %v587 = vld [vmem:[#allocation9 + $0x660] sm:$0xff]
      %v588 = vld [vmem:[#allocation9 + $0x668] sm:$0xff]
      %v589 = vld [vmem:[#allocation9 + $0x670] sm:$0xff]
      %v590 = vld [vmem:[#allocation9 + $0x678] sm:$0xff]
      %v591 = vld [vmem:[#allocation9 + $0x680] sm:$0xff]
      %v592 = vld [vmem:[#allocation9 + $0x688] sm:$0xff]
      %v593 = vld [vmem:[#allocation9 + $0x690] sm:$0xff]
      %v594 = vld [vmem:[#allocation9 + $0x698] sm:$0xff]
      %v595 = vld [vmem:[#allocation9 + $0x6a0] sm:$0xff]
      %v596 = vld [vmem:[#allocation9 + $0x6a8] sm:$0xff]
      %v597 = vld [vmem:[#allocation9 + $0x6b0] sm:$0xff]
      %v598 = vld [vmem:[#allocation9 + $0x6b8] sm:$0xff]
      %v599 = vld [vmem:[#allocation9 + $0x6c0] sm:$0xff]
      %v600 = vld [vmem:[#allocation9 + $0x6c8] sm:$0xff]
      %v601 = vld [vmem:[#allocation9 + $0x6d0] sm:$0xff]
      %v602 = vld [vmem:[#allocation9 + $0x6d8] sm:$0xff]
      %v603 = vld [vmem:[#allocation9 + $0x6e0] sm:$0xff]
      %v604 = vld [vmem:[#allocation9 + $0x6e8] sm:$0xff]
      %v605 = vld [vmem:[#allocation9 + $0x6f0] sm:$0xff]
      %v606 = vld [vmem:[#allocation9 + $0x6f8] sm:$0xff]
      %v607 = vld [vmem:[#allocation9 + $0x700] sm:$0xff]
      %v608 = vld [vmem:[#allocation9 + $0x708] sm:$0xff]
      %v609 = vld [vmem:[#allocation9 + $0x710] sm:$0xff]
      %v610 = vld [vmem:[#allocation9 + $0x718] sm:$0xff]
      %v611 = vld [vmem:[#allocation9 + $0x720] sm:$0xff]
      %v612 = vld [vmem:[#allocation9 + $0x728] sm:$0xff]
      %v613 = vld [vmem:[#allocation9 + $0x730] sm:$0xff]
      %v614 = vld [vmem:[#allocation9 + $0x738] sm:$0xff]
      %v615 = vld [vmem:[#allocation9 + $0x740] sm:$0xff]
      %v616 = vld [vmem:[#allocation9 + $0x748] sm:$0xff]
      %v617 = vld [vmem:[#allocation9 + $0x750] sm:$0xff]
      %v618 = vld [vmem:[#allocation9 + $0x758] sm:$0xff]
      %v619 = vld [vmem:[#allocation9 + $0x760] sm:$0xff]
      %v620 = vld [vmem:[#allocation9 + $0x768] sm:$0xff]
      %v621 = vld [vmem:[#allocation9 + $0x770] sm:$0xff]
      %v622 = vld [vmem:[#allocation9 + $0x778] sm:$0xff]
      %v623 = vld [vmem:[#allocation9 + $0x780] sm:$0xff]
      %v624 = vld [vmem:[#allocation9 + $0x788] sm:$0xff]
      %v625 = vld [vmem:[#allocation9 + $0x790] sm:$0xff]
      %v626 = vld [vmem:[#allocation9 + $0x798] sm:$0xff]
      %v627 = vld [vmem:[#allocation9 + $0x7a0] sm:$0xff]
      %v628 = vld [vmem:[#allocation9 + $0x7a8] sm:$0xff]
      %v629 = vld [vmem:[#allocation9 + $0x7b0] sm:$0xff]
      %v630 = vld [vmem:[#allocation9 + $0x7b8] sm:$0xff]
      %v631 = vld [vmem:[#allocation9 + $0x7c0] sm:$0xff]
      %v632 = vld [vmem:[#allocation9 + $0x7c8] sm:$0xff]
      %v633 = vld [vmem:[#allocation9 + $0x7d0] sm:$0xff]
      %v634 = vld [vmem:[#allocation9 + $0x7d8] sm:$0xff]
      %v635 = vld [vmem:[#allocation9 + $0x7e0] sm:$0xff]
      %v636 = vld [vmem:[#allocation9 + $0x7e8] sm:$0xff]
      %v637 = vld [vmem:[#allocation9 + $0x7f0] sm:$0xff]
      %v638 = vld [vmem:[#allocation9 + $0x7f8] sm:$0xff]
      %v639 = vld [vmem:[#allocation11] sm:$0xff]
      %v641 = vperm.slane %v639, 0
      %v642 = vperm.slane %v639, 1
      %v643 = vperm.slane %v639, 2
      %v644 = vperm.slane %v639, 3
      %v645 = vperm.slane %v639, 4
      %v646 = vperm.slane %v639, 5
      %v647 = vperm.slane %v639, 6
      %v648 = vperm.slane %v639, 7
      %v913 = vunpack.c.l.b16 %v383
      %v914 = vunpack.c.h.b16 %v383
      %v915 = vunpack.c.l.b16 %v384
      %v916 = vunpack.c.h.b16 %v384
      %v917 = vunpack.c.l.b16 %v385
      %v918 = vunpack.c.h.b16 %v385
      %v919 = vunpack.c.l.b16 %v386
      %v920 = vunpack.c.h.b16 %v386
      %v921 = vunpack.c.l.b16 %v387
      %v922 = vunpack.c.h.b16 %v387
      %v923 = vunpack.c.l.b16 %v388
      %v924 = vunpack.c.h.b16 %v388
      %v925 = vunpack.c.l.b16 %v389
      %v926 = vunpack.c.h.b16 %v389
      %v927 = vunpack.c.l.b16 %v390
      %v928 = vunpack.c.h.b16 %v390
      %v929 = vunpack.c.l.b16 %v391
      %v930 = vunpack.c.h.b16 %v391
      %v931 = vunpack.c.l.b16 %v392
      %v932 = vunpack.c.h.b16 %v392
      %v933 = vunpack.c.l.b16 %v393
      %v934 = vunpack.c.h.b16 %v393
      %v935 = vunpack.c.l.b16 %v394
      %v936 = vunpack.c.h.b16 %v394
      %v937 = vunpack.c.l.b16 %v395
      %v938 = vunpack.c.h.b16 %v395
      %v939 = vunpack.c.l.b16 %v396
      %v940 = vunpack.c.h.b16 %v396
      %v941 = vunpack.c.l.b16 %v397
      %v942 = vunpack.c.h.b16 %v397
      %v943 = vunpack.c.l.b16 %v398
      %v944 = vunpack.c.h.b16 %v398
      %v945 = vunpack.c.l.b16 %v399
      %v946 = vunpack.c.h.b16 %v399
      %v947 = vunpack.c.l.b16 %v400
      %v948 = vunpack.c.h.b16 %v400
      %v949 = vunpack.c.l.b16 %v401
      %v950 = vunpack.c.h.b16 %v401
      %v951 = vunpack.c.l.b16 %v402
      %v952 = vunpack.c.h.b16 %v402
      %v953 = vunpack.c.l.b16 %v403
      %v954 = vunpack.c.h.b16 %v403
      %v955 = vunpack.c.l.b16 %v404
      %v956 = vunpack.c.h.b16 %v404
      %v957 = vunpack.c.l.b16 %v405
      %v958 = vunpack.c.h.b16 %v405
      %v959 = vunpack.c.l.b16 %v406
      %v960 = vunpack.c.h.b16 %v406
      %v961 = vunpack.c.l.b16 %v407
      %v962 = vunpack.c.h.b16 %v407
      %v963 = vunpack.c.l.b16 %v408
      %v964 = vunpack.c.h.b16 %v408
      %v965 = vunpack.c.l.b16 %v409
      %v966 = vunpack.c.h.b16 %v409
      %v967 = vunpack.c.l.b16 %v410
      %v968 = vunpack.c.h.b16 %v410
      %v969 = vunpack.c.l.b16 %v411
      %v970 = vunpack.c.h.b16 %v411
      %v971 = vunpack.c.l.b16 %v412
      %v972 = vunpack.c.h.b16 %v412
      %v973 = vunpack.c.l.b16 %v413
      %v974 = vunpack.c.h.b16 %v413
      %v975 = vunpack.c.l.b16 %v414
      %v976 = vunpack.c.h.b16 %v414
      %v977 = vunpack.c.l.b16 %v415
      %v978 = vunpack.c.h.b16 %v415
      %v979 = vunpack.c.l.b16 %v416
      %v980 = vunpack.c.h.b16 %v416
      %v981 = vunpack.c.l.b16 %v417
      %v982 = vunpack.c.h.b16 %v417
      %v983 = vunpack.c.l.b16 %v418
      %v984 = vunpack.c.h.b16 %v418
      %v985 = vunpack.c.l.b16 %v419
      %v986 = vunpack.c.h.b16 %v419
      %v987 = vunpack.c.l.b16 %v420
      %v988 = vunpack.c.h.b16 %v420
      %v989 = vunpack.c.l.b16 %v421
      %v990 = vunpack.c.h.b16 %v421
      %v991 = vunpack.c.l.b16 %v422
      %v992 = vunpack.c.h.b16 %v422
      %v993 = vunpack.c.l.b16 %v423
      %v994 = vunpack.c.h.b16 %v423
      %v995 = vunpack.c.l.b16 %v424
      %v996 = vunpack.c.h.b16 %v424
      %v997 = vunpack.c.l.b16 %v425
      %v998 = vunpack.c.h.b16 %v425
      %v999 = vunpack.c.l.b16 %v426
      %v1000 = vunpack.c.h.b16 %v426
      %v1001 = vunpack.c.l.b16 %v427
      %v1002 = vunpack.c.h.b16 %v427
      %v1003 = vunpack.c.l.b16 %v428
      %v1004 = vunpack.c.h.b16 %v428
      %v1005 = vunpack.c.l.b16 %v429
      %v1006 = vunpack.c.h.b16 %v429
      %v1007 = vunpack.c.l.b16 %v430
      %v1008 = vunpack.c.h.b16 %v430
      %v1009 = vunpack.c.l.b16 %v431
      %v1010 = vunpack.c.h.b16 %v431
      %v1011 = vunpack.c.l.b16 %v432
      %v1012 = vunpack.c.h.b16 %v432
      %v1013 = vunpack.c.l.b16 %v433
      %v1014 = vunpack.c.h.b16 %v433
      %v1015 = vunpack.c.l.b16 %v434
      %v1016 = vunpack.c.h.b16 %v434
      %v1017 = vunpack.c.l.b16 %v435
      %v1018 = vunpack.c.h.b16 %v435
      %v1019 = vunpack.c.l.b16 %v436
      %v1020 = vunpack.c.h.b16 %v436
      %v1021 = vunpack.c.l.b16 %v437
      %v1022 = vunpack.c.h.b16 %v437
      %v1023 = vunpack.c.l.b16 %v438
      %v1024 = vunpack.c.h.b16 %v438
      %v1025 = vunpack.c.l.b16 %v439
      %v1026 = vunpack.c.h.b16 %v439
      %v1027 = vunpack.c.l.b16 %v440
      %v1028 = vunpack.c.h.b16 %v440
      %v1029 = vunpack.c.l.b16 %v441
      %v1030 = vunpack.c.h.b16 %v441
      %v1031 = vunpack.c.l.b16 %v442
      %v1032 = vunpack.c.h.b16 %v442
      %v1033 = vunpack.c.l.b16 %v443
      %v1034 = vunpack.c.h.b16 %v443
      %v1035 = vunpack.c.l.b16 %v444
      %v1036 = vunpack.c.h.b16 %v444
      %v1037 = vunpack.c.l.b16 %v445
      %v1038 = vunpack.c.h.b16 %v445
      %v1039 = vunpack.c.l.b16 %v446
      %v1040 = vunpack.c.h.b16 %v446
      %v1041 = vunpack.c.l.b16 %v447
      %v1042 = vunpack.c.h.b16 %v447
      %v1043 = vunpack.c.l.b16 %v448
      %v1044 = vunpack.c.h.b16 %v448
      %v1045 = vunpack.c.l.b16 %v449
      %v1046 = vunpack.c.h.b16 %v449
      %v1047 = vunpack.c.l.b16 %v450
      %v1048 = vunpack.c.h.b16 %v450
      %v1049 = vunpack.c.l.b16 %v451
      %v1050 = vunpack.c.h.b16 %v451
      %v1051 = vunpack.c.l.b16 %v452
      %v1052 = vunpack.c.h.b16 %v452
      %v1053 = vunpack.c.l.b16 %v453
      %v1054 = vunpack.c.h.b16 %v453
      %v1055 = vunpack.c.l.b16 %v454
      %v1056 = vunpack.c.h.b16 %v454
      %v1057 = vunpack.c.l.b16 %v455
      %v1058 = vunpack.c.h.b16 %v455
      %v1059 = vunpack.c.l.b16 %v456
      %v1060 = vunpack.c.h.b16 %v456
      %v1061 = vunpack.c.l.b16 %v457
      %v1062 = vunpack.c.h.b16 %v457
      %v1063 = vunpack.c.l.b16 %v458
      %v1064 = vunpack.c.h.b16 %v458
      %v1065 = vunpack.c.l.b16 %v459
      %v1066 = vunpack.c.h.b16 %v459
      %v1067 = vunpack.c.l.b16 %v460
      %v1068 = vunpack.c.h.b16 %v460
      %v1069 = vunpack.c.l.b16 %v461
      %v1070 = vunpack.c.h.b16 %v461
      %v1071 = vunpack.c.l.b16 %v462
      %v1072 = vunpack.c.h.b16 %v462
      %v1073 = vunpack.c.l.b16 %v463
      %v1074 = vunpack.c.h.b16 %v463
      %v1075 = vunpack.c.l.b16 %v464
      %v1076 = vunpack.c.h.b16 %v464
      %v1077 = vunpack.c.l.b16 %v465
      %v1078 = vunpack.c.h.b16 %v465
      %v1079 = vunpack.c.l.b16 %v466
      %v1080 = vunpack.c.h.b16 %v466
      %v1081 = vunpack.c.l.b16 %v467
      %v1082 = vunpack.c.h.b16 %v467
      %v1083 = vunpack.c.l.b16 %v468
      %v1084 = vunpack.c.h.b16 %v468
      %v1085 = vunpack.c.l.b16 %v469
      %v1086 = vunpack.c.h.b16 %v469
      %v1087 = vunpack.c.l.b16 %v470
      %v1088 = vunpack.c.h.b16 %v470
      %v1089 = vunpack.c.l.b16 %v471
      %v1090 = vunpack.c.h.b16 %v471
      %v1091 = vunpack.c.l.b16 %v472
      %v1092 = vunpack.c.h.b16 %v472
      %v1093 = vunpack.c.l.b16 %v473
      %v1094 = vunpack.c.h.b16 %v473
      %v1095 = vunpack.c.l.b16 %v474
      %v1096 = vunpack.c.h.b16 %v474
      %v1097 = vunpack.c.l.b16 %v475
      %v1098 = vunpack.c.h.b16 %v475
      %v1099 = vunpack.c.l.b16 %v476
      %v1100 = vunpack.c.h.b16 %v476
      %v1101 = vunpack.c.l.b16 %v477
      %v1102 = vunpack.c.h.b16 %v477
      %v1103 = vunpack.c.l.b16 %v478
      %v1104 = vunpack.c.h.b16 %v478
      %v1105 = vunpack.c.l.b16 %v479
      %v1106 = vunpack.c.h.b16 %v479
      %v1107 = vunpack.c.l.b16 %v480
      %v1108 = vunpack.c.h.b16 %v480
      %v1109 = vunpack.c.l.b16 %v481
      %v1110 = vunpack.c.h.b16 %v481
      %v1111 = vunpack.c.l.b16 %v482
      %v1112 = vunpack.c.h.b16 %v482
      %v1113 = vunpack.c.l.b16 %v483
      %v1114 = vunpack.c.h.b16 %v483
      %v1115 = vunpack.c.l.b16 %v484
      %v1116 = vunpack.c.h.b16 %v484
      %v1117 = vunpack.c.l.b16 %v485
      %v1118 = vunpack.c.h.b16 %v485
      %v1119 = vunpack.c.l.b16 %v486
      %v1120 = vunpack.c.h.b16 %v486
      %v1121 = vunpack.c.l.b16 %v487
      %v1122 = vunpack.c.h.b16 %v487
      %v1123 = vunpack.c.l.b16 %v488
      %v1124 = vunpack.c.h.b16 %v488
      %v1125 = vunpack.c.l.b16 %v489
      %v1126 = vunpack.c.h.b16 %v489
      %v1127 = vunpack.c.l.b16 %v490
      %v1128 = vunpack.c.h.b16 %v490
      %v1129 = vunpack.c.l.b16 %v491
      %v1130 = vunpack.c.h.b16 %v491
      %v1131 = vunpack.c.l.b16 %v492
      %v1132 = vunpack.c.h.b16 %v492
      %v1133 = vunpack.c.l.b16 %v493
      %v1134 = vunpack.c.h.b16 %v493
      %v1135 = vunpack.c.l.b16 %v494
      %v1136 = vunpack.c.h.b16 %v494
      %v1137 = vunpack.c.l.b16 %v495
      %v1138 = vunpack.c.h.b16 %v495
      %v1139 = vunpack.c.l.b16 %v496
      %v1140 = vunpack.c.h.b16 %v496
      %v1141 = vunpack.c.l.b16 %v497
      %v1142 = vunpack.c.h.b16 %v497
      %v1143 = vunpack.c.l.b16 %v498
      %v1144 = vunpack.c.h.b16 %v498
      %v1145 = vunpack.c.l.b16 %v499
      %v1146 = vunpack.c.h.b16 %v499
      %v1147 = vunpack.c.l.b16 %v500
      %v1148 = vunpack.c.h.b16 %v500
      %v1149 = vunpack.c.l.b16 %v501
      %v1150 = vunpack.c.h.b16 %v501
      %v1151 = vunpack.c.l.b16 %v502
      %v1152 = vunpack.c.h.b16 %v502
      %v1153 = vunpack.c.l.b16 %v503
      %v1154 = vunpack.c.h.b16 %v503
      %v1155 = vunpack.c.l.b16 %v504
      %v1156 = vunpack.c.h.b16 %v504
      %v1157 = vunpack.c.l.b16 %v505
      %v1158 = vunpack.c.h.b16 %v505
      %v1159 = vunpack.c.l.b16 %v506
      %v1160 = vunpack.c.h.b16 %v506
      %v1161 = vunpack.c.l.b16 %v507
      %v1162 = vunpack.c.h.b16 %v507
      %v1163 = vunpack.c.l.b16 %v508
      %v1164 = vunpack.c.h.b16 %v508
      %v1165 = vunpack.c.l.b16 %v509
      %v1166 = vunpack.c.h.b16 %v509
      %v1167 = vunpack.c.l.b16 %v510
      %v1168 = vunpack.c.h.b16 %v510
      %v1169 = vunpack.c.l.b16 %v511
      %v1170 = vunpack.c.h.b16 %v511
      %v1171 = vunpack.c.l.b16 %v512
      %v1172 = vunpack.c.h.b16 %v512
      %v1173 = vunpack.c.l.b16 %v513
      %v1174 = vunpack.c.h.b16 %v513
      %v1175 = vunpack.c.l.b16 %v514
      %v1176 = vunpack.c.h.b16 %v514
      %v1177 = vunpack.c.l.b16 %v515
      %v1178 = vunpack.c.h.b16 %v515
      %v1179 = vunpack.c.l.b16 %v516
      %v1180 = vunpack.c.h.b16 %v516
      %v1181 = vunpack.c.l.b16 %v517
      %v1182 = vunpack.c.h.b16 %v517
      %v1183 = vunpack.c.l.b16 %v518
      %v1184 = vunpack.c.h.b16 %v518
      %v1185 = vunpack.c.l.b16 %v519
      %v1186 = vunpack.c.h.b16 %v519
      %v1187 = vunpack.c.l.b16 %v520
      %v1188 = vunpack.c.h.b16 %v520
      %v1189 = vunpack.c.l.b16 %v521
      %v1190 = vunpack.c.h.b16 %v521
      %v1191 = vunpack.c.l.b16 %v522
      %v1192 = vunpack.c.h.b16 %v522
      %v1193 = vunpack.c.l.b16 %v523
      %v1194 = vunpack.c.h.b16 %v523
      %v1195 = vunpack.c.l.b16 %v524
      %v1196 = vunpack.c.h.b16 %v524
      %v1197 = vunpack.c.l.b16 %v525
      %v1198 = vunpack.c.h.b16 %v525
      %v1199 = vunpack.c.l.b16 %v526
      %v1200 = vunpack.c.h.b16 %v526
      %v1201 = vunpack.c.l.b16 %v527
      %v1202 = vunpack.c.h.b16 %v527
      %v1203 = vunpack.c.l.b16 %v528
      %v1204 = vunpack.c.h.b16 %v528
      %v1205 = vunpack.c.l.b16 %v529
      %v1206 = vunpack.c.h.b16 %v529
      %v1207 = vunpack.c.l.b16 %v530
      %v1208 = vunpack.c.h.b16 %v530
      %v1209 = vunpack.c.l.b16 %v531
      %v1210 = vunpack.c.h.b16 %v531
      %v1211 = vunpack.c.l.b16 %v532
      %v1212 = vunpack.c.h.b16 %v532
      %v1213 = vunpack.c.l.b16 %v533
      %v1214 = vunpack.c.h.b16 %v533
      %v1215 = vunpack.c.l.b16 %v534
      %v1216 = vunpack.c.h.b16 %v534
      %v1217 = vunpack.c.l.b16 %v535
      %v1218 = vunpack.c.h.b16 %v535
      %v1219 = vunpack.c.l.b16 %v536
      %v1220 = vunpack.c.h.b16 %v536
      %v1221 = vunpack.c.l.b16 %v537
      %v1222 = vunpack.c.h.b16 %v537
      %v1223 = vunpack.c.l.b16 %v538
      %v1224 = vunpack.c.h.b16 %v538
      %v1225 = vunpack.c.l.b16 %v539
      %v1226 = vunpack.c.h.b16 %v539
      %v1227 = vunpack.c.l.b16 %v540
      %v1228 = vunpack.c.h.b16 %v540
      %v1229 = vunpack.c.l.b16 %v541
      %v1230 = vunpack.c.h.b16 %v541
      %v1231 = vunpack.c.l.b16 %v542
      %v1232 = vunpack.c.h.b16 %v542
      %v1233 = vunpack.c.l.b16 %v543
      %v1234 = vunpack.c.h.b16 %v543
      %v1235 = vunpack.c.l.b16 %v544
      %v1236 = vunpack.c.h.b16 %v544
      %v1237 = vunpack.c.l.b16 %v545
      %v1238 = vunpack.c.h.b16 %v545
      %v1239 = vunpack.c.l.b16 %v546
      %v1240 = vunpack.c.h.b16 %v546
      %v1241 = vunpack.c.l.b16 %v547
      %v1242 = vunpack.c.h.b16 %v547
      %v1243 = vunpack.c.l.b16 %v548
      %v1244 = vunpack.c.h.b16 %v548
      %v1245 = vunpack.c.l.b16 %v549
      %v1246 = vunpack.c.h.b16 %v549
      %v1247 = vunpack.c.l.b16 %v550
      %v1248 = vunpack.c.h.b16 %v550
      %v1249 = vunpack.c.l.b16 %v551
      %v1250 = vunpack.c.h.b16 %v551
      %v1251 = vunpack.c.l.b16 %v552
      %v1252 = vunpack.c.h.b16 %v552
      %v1253 = vunpack.c.l.b16 %v553
      %v1254 = vunpack.c.h.b16 %v553
      %v1255 = vunpack.c.l.b16 %v554
      %v1256 = vunpack.c.h.b16 %v554
      %v1257 = vunpack.c.l.b16 %v555
      %v1258 = vunpack.c.h.b16 %v555
      %v1259 = vunpack.c.l.b16 %v556
      %v1260 = vunpack.c.h.b16 %v556
      %v1261 = vunpack.c.l.b16 %v557
      %v1262 = vunpack.c.h.b16 %v557
      %v1263 = vunpack.c.l.b16 %v558
      %v1264 = vunpack.c.h.b16 %v558
      %v1265 = vunpack.c.l.b16 %v559
      %v1266 = vunpack.c.h.b16 %v559
      %v1267 = vunpack.c.l.b16 %v560
      %v1268 = vunpack.c.h.b16 %v560
      %v1269 = vunpack.c.l.b16 %v561
      %v1270 = vunpack.c.h.b16 %v561
      %v1271 = vunpack.c.l.b16 %v562
      %v1272 = vunpack.c.h.b16 %v562
      %v1273 = vunpack.c.l.b16 %v563
      %v1274 = vunpack.c.h.b16 %v563
      %v1275 = vunpack.c.l.b16 %v564
      %v1276 = vunpack.c.h.b16 %v564
      %v1277 = vunpack.c.l.b16 %v565
      %v1278 = vunpack.c.h.b16 %v565
      %v1279 = vunpack.c.l.b16 %v566
      %v1280 = vunpack.c.h.b16 %v566
      %v1281 = vunpack.c.l.b16 %v567
      %v1282 = vunpack.c.h.b16 %v567
      %v1283 = vunpack.c.l.b16 %v568
      %v1284 = vunpack.c.h.b16 %v568
      %v1285 = vunpack.c.l.b16 %v569
      %v1286 = vunpack.c.h.b16 %v569
      %v1287 = vunpack.c.l.b16 %v570
      %v1288 = vunpack.c.h.b16 %v570
      %v1289 = vunpack.c.l.b16 %v571
      %v1290 = vunpack.c.h.b16 %v571
      %v1291 = vunpack.c.l.b16 %v572
      %v1292 = vunpack.c.h.b16 %v572
      %v1293 = vunpack.c.l.b16 %v573
      %v1294 = vunpack.c.h.b16 %v573
      %v1295 = vunpack.c.l.b16 %v574
      %v1296 = vunpack.c.h.b16 %v574
      %v1297 = vunpack.c.l.b16 %v575
      %v1298 = vunpack.c.h.b16 %v575
      %v1299 = vunpack.c.l.b16 %v576
      %v1300 = vunpack.c.h.b16 %v576
      %v1301 = vunpack.c.l.b16 %v577
      %v1302 = vunpack.c.h.b16 %v577
      %v1303 = vunpack.c.l.b16 %v578
      %v1304 = vunpack.c.h.b16 %v578
      %v1305 = vunpack.c.l.b16 %v579
      %v1306 = vunpack.c.h.b16 %v579
      %v1307 = vunpack.c.l.b16 %v580
      %v1308 = vunpack.c.h.b16 %v580
      %v1309 = vunpack.c.l.b16 %v581
      %v1310 = vunpack.c.h.b16 %v581
      %v1311 = vunpack.c.l.b16 %v582
      %v1312 = vunpack.c.h.b16 %v582
      %v1313 = vunpack.c.l.b16 %v583
      %v1314 = vunpack.c.h.b16 %v583
      %v1315 = vunpack.c.l.b16 %v584
      %v1316 = vunpack.c.h.b16 %v584
      %v1317 = vunpack.c.l.b16 %v585
      %v1318 = vunpack.c.h.b16 %v585
      %v1319 = vunpack.c.l.b16 %v586
      %v1320 = vunpack.c.h.b16 %v586
      %v1321 = vunpack.c.l.b16 %v587
      %v1322 = vunpack.c.h.b16 %v587
      %v1323 = vunpack.c.l.b16 %v588
      %v1324 = vunpack.c.h.b16 %v588
      %v1325 = vunpack.c.l.b16 %v589
      %v1326 = vunpack.c.h.b16 %v589
      %v1327 = vunpack.c.l.b16 %v590
      %v1328 = vunpack.c.h.b16 %v590
      %v1329 = vunpack.c.l.b16 %v591
      %v1330 = vunpack.c.h.b16 %v591
      %v1331 = vunpack.c.l.b16 %v592
      %v1332 = vunpack.c.h.b16 %v592
      %v1333 = vunpack.c.l.b16 %v593
      %v1334 = vunpack.c.h.b16 %v593
      %v1335 = vunpack.c.l.b16 %v594
      %v1336 = vunpack.c.h.b16 %v594
      %v1337 = vunpack.c.l.b16 %v595
      %v1338 = vunpack.c.h.b16 %v595
      %v1339 = vunpack.c.l.b16 %v596
      %v1340 = vunpack.c.h.b16 %v596
      %v1341 = vunpack.c.l.b16 %v597
      %v1342 = vunpack.c.h.b16 %v597
      %v1343 = vunpack.c.l.b16 %v598
      %v1344 = vunpack.c.h.b16 %v598
      %v1345 = vunpack.c.l.b16 %v599
      %v1346 = vunpack.c.h.b16 %v599
      %v1347 = vunpack.c.l.b16 %v600
      %v1348 = vunpack.c.h.b16 %v600
      %v1349 = vunpack.c.l.b16 %v601
      %v1350 = vunpack.c.h.b16 %v601
      %v1351 = vunpack.c.l.b16 %v602
      %v1352 = vunpack.c.h.b16 %v602
      %v1353 = vunpack.c.l.b16 %v603
      %v1354 = vunpack.c.h.b16 %v603
      %v1355 = vunpack.c.l.b16 %v604
      %v1356 = vunpack.c.h.b16 %v604
      %v1357 = vunpack.c.l.b16 %v605
      %v1358 = vunpack.c.h.b16 %v605
      %v1359 = vunpack.c.l.b16 %v606
      %v1360 = vunpack.c.h.b16 %v606
      %v1361 = vunpack.c.l.b16 %v607
      %v1362 = vunpack.c.h.b16 %v607
      %v1363 = vunpack.c.l.b16 %v608
      %v1364 = vunpack.c.h.b16 %v608
      %v1365 = vunpack.c.l.b16 %v609
      %v1366 = vunpack.c.h.b16 %v609
      %v1367 = vunpack.c.l.b16 %v610
      %v1368 = vunpack.c.h.b16 %v610
      %v1369 = vunpack.c.l.b16 %v611
      %v1370 = vunpack.c.h.b16 %v611
      %v1371 = vunpack.c.l.b16 %v612
      %v1372 = vunpack.c.h.b16 %v612
      %v1373 = vunpack.c.l.b16 %v613
      %v1374 = vunpack.c.h.b16 %v613
      %v1375 = vunpack.c.l.b16 %v614
      %v1376 = vunpack.c.h.b16 %v614
      %v1377 = vunpack.c.l.b16 %v615
      %v1378 = vunpack.c.h.b16 %v615
      %v1379 = vunpack.c.l.b16 %v616
      %v1380 = vunpack.c.h.b16 %v616
      %v1381 = vunpack.c.l.b16 %v617
      %v1382 = vunpack.c.h.b16 %v617
      %v1383 = vunpack.c.l.b16 %v618
      %v1384 = vunpack.c.h.b16 %v618
      %v1385 = vunpack.c.l.b16 %v619
      %v1386 = vunpack.c.h.b16 %v619
      %v1387 = vunpack.c.l.b16 %v620
      %v1388 = vunpack.c.h.b16 %v620
      %v1389 = vunpack.c.l.b16 %v621
      %v1390 = vunpack.c.h.b16 %v621
      %v1391 = vunpack.c.l.b16 %v622
      %v1392 = vunpack.c.h.b16 %v622
      %v1393 = vunpack.c.l.b16 %v623
      %v1394 = vunpack.c.h.b16 %v623
      %v1395 = vunpack.c.l.b16 %v624
      %v1396 = vunpack.c.h.b16 %v624
      %v1397 = vunpack.c.l.b16 %v625
      %v1398 = vunpack.c.h.b16 %v625
      %v1399 = vunpack.c.l.b16 %v626
      %v1400 = vunpack.c.h.b16 %v626
      %v1401 = vunpack.c.l.b16 %v627
      %v1402 = vunpack.c.h.b16 %v627
      %v1403 = vunpack.c.l.b16 %v628
      %v1404 = vunpack.c.h.b16 %v628
      %v1405 = vunpack.c.l.b16 %v629
      %v1406 = vunpack.c.h.b16 %v629
      %v1407 = vunpack.c.l.b16 %v630
      %v1408 = vunpack.c.h.b16 %v630
      %v1409 = vunpack.c.l.b16 %v631
      %v1410 = vunpack.c.h.b16 %v631
      %v1411 = vunpack.c.l.b16 %v632
      %v1412 = vunpack.c.h.b16 %v632
      %v1413 = vunpack.c.l.b16 %v633
      %v1414 = vunpack.c.h.b16 %v633
      %v1415 = vunpack.c.l.b16 %v634
      %v1416 = vunpack.c.h.b16 %v634
      %v1417 = vunpack.c.l.b16 %v635
      %v1418 = vunpack.c.h.b16 %v635
      %v1419 = vunpack.c.l.b16 %v636
      %v1420 = vunpack.c.h.b16 %v636
      %v1421 = vunpack.c.l.b16 %v637
      %v1422 = vunpack.c.h.b16 %v637
      %v1423 = vunpack.c.l.b16 %v638
      %v1424 = vunpack.c.h.b16 %v638
      %v1425 = vpack.c.b16 %v921, %v913
      %v1426 = vpack.c.b16 %v922, %v914
      %v1427 = vpack.c.b16 %v923, %v915
      %v1428 = vpack.c.b16 %v924, %v916
      %v1429 = vpack.c.b16 %v925, %v917
      %v1430 = vpack.c.b16 %v926, %v918
      %v1431 = vpack.c.b16 %v927, %v919
      %v1432 = vpack.c.b16 %v928, %v920
      %v1433 = vpack.c.b16 %v937, %v929
      %v1434 = vpack.c.b16 %v938, %v930
      %v1435 = vpack.c.b16 %v939, %v931
      %v1436 = vpack.c.b16 %v940, %v932
      %v1437 = vpack.c.b16 %v941, %v933
      %v1438 = vpack.c.b16 %v942, %v934
      %v1439 = vpack.c.b16 %v943, %v935
      %v1440 = vpack.c.b16 %v944, %v936
      %v1441 = vpack.c.b16 %v953, %v945
      %v1442 = vpack.c.b16 %v954, %v946
      %v1443 = vpack.c.b16 %v955, %v947
      %v1444 = vpack.c.b16 %v956, %v948
      %v1445 = vpack.c.b16 %v957, %v949
      %v1446 = vpack.c.b16 %v958, %v950
      %v1447 = vpack.c.b16 %v959, %v951
      %v1448 = vpack.c.b16 %v960, %v952
      %v1449 = vpack.c.b16 %v969, %v961
      %v1450 = vpack.c.b16 %v970, %v962
      %v1451 = vpack.c.b16 %v971, %v963
      %v1452 = vpack.c.b16 %v972, %v964
      %v1453 = vpack.c.b16 %v973, %v965
      %v1454 = vpack.c.b16 %v974, %v966
      %v1455 = vpack.c.b16 %v975, %v967
      %v1456 = vpack.c.b16 %v976, %v968
      %v1457 = vpack.c.b16 %v985, %v977
      %v1458 = vpack.c.b16 %v986, %v978
      %v1459 = vpack.c.b16 %v987, %v979
      %v1460 = vpack.c.b16 %v988, %v980
      %v1461 = vpack.c.b16 %v989, %v981
      %v1462 = vpack.c.b16 %v990, %v982
      %v1463 = vpack.c.b16 %v991, %v983
      %v1464 = vpack.c.b16 %v992, %v984
      %v1465 = vpack.c.b16 %v1001, %v993
      %v1466 = vpack.c.b16 %v1002, %v994
      %v1467 = vpack.c.b16 %v1003, %v995
      %v1468 = vpack.c.b16 %v1004, %v996
      %v1469 = vpack.c.b16 %v1005, %v997
      %v1470 = vpack.c.b16 %v1006, %v998
      %v1471 = vpack.c.b16 %v1007, %v999
      %v1472 = vpack.c.b16 %v1008, %v1000
      %v1473 = vpack.c.b16 %v1017, %v1009
      %v1474 = vpack.c.b16 %v1018, %v1010
      %v1475 = vpack.c.b16 %v1019, %v1011
      %v1476 = vpack.c.b16 %v1020, %v1012
      %v1477 = vpack.c.b16 %v1021, %v1013
      %v1478 = vpack.c.b16 %v1022, %v1014
      %v1479 = vpack.c.b16 %v1023, %v1015
      %v1480 = vpack.c.b16 %v1024, %v1016
      %v1481 = vpack.c.b16 %v1033, %v1025
      %v1482 = vpack.c.b16 %v1034, %v1026
      %v1483 = vpack.c.b16 %v1035, %v1027
      %v1484 = vpack.c.b16 %v1036, %v1028
      %v1485 = vpack.c.b16 %v1037, %v1029
      %v1486 = vpack.c.b16 %v1038, %v1030
      %v1487 = vpack.c.b16 %v1039, %v1031
      %v1488 = vpack.c.b16 %v1040, %v1032
      %v1489 = vpack.c.b16 %v1049, %v1041
      %v1490 = vpack.c.b16 %v1050, %v1042
      %v1491 = vpack.c.b16 %v1051, %v1043
      %v1492 = vpack.c.b16 %v1052, %v1044
      %v1493 = vpack.c.b16 %v1053, %v1045
      %v1494 = vpack.c.b16 %v1054, %v1046
      %v1495 = vpack.c.b16 %v1055, %v1047
      %v1496 = vpack.c.b16 %v1056, %v1048
      %v1497 = vpack.c.b16 %v1065, %v1057
      %v1498 = vpack.c.b16 %v1066, %v1058
      %v1499 = vpack.c.b16 %v1067, %v1059
      %v1500 = vpack.c.b16 %v1068, %v1060
      %v1501 = vpack.c.b16 %v1069, %v1061
      %v1502 = vpack.c.b16 %v1070, %v1062
      %v1503 = vpack.c.b16 %v1071, %v1063
      %v1504 = vpack.c.b16 %v1072, %v1064
      %v1505 = vpack.c.b16 %v1081, %v1073
      %v1506 = vpack.c.b16 %v1082, %v1074
      %v1507 = vpack.c.b16 %v1083, %v1075
      %v1508 = vpack.c.b16 %v1084, %v1076
      %v1509 = vpack.c.b16 %v1085, %v1077
      %v1510 = vpack.c.b16 %v1086, %v1078
      %v1511 = vpack.c.b16 %v1087, %v1079
      %v1512 = vpack.c.b16 %v1088, %v1080
      %v1513 = vpack.c.b16 %v1097, %v1089
      %v1514 = vpack.c.b16 %v1098, %v1090
      %v1515 = vpack.c.b16 %v1099, %v1091
      %v1516 = vpack.c.b16 %v1100, %v1092
      %v1517 = vpack.c.b16 %v1101, %v1093
      %v1518 = vpack.c.b16 %v1102, %v1094
      %v1519 = vpack.c.b16 %v1103, %v1095
      %v1520 = vpack.c.b16 %v1104, %v1096
      %v1521 = vpack.c.b16 %v1113, %v1105
      %v1522 = vpack.c.b16 %v1114, %v1106
      %v1523 = vpack.c.b16 %v1115, %v1107
      %v1524 = vpack.c.b16 %v1116, %v1108
      %v1525 = vpack.c.b16 %v1117, %v1109
      %v1526 = vpack.c.b16 %v1118, %v1110
      %v1527 = vpack.c.b16 %v1119, %v1111
      %v1528 = vpack.c.b16 %v1120, %v1112
      %v1529 = vpack.c.b16 %v1129, %v1121
      %v1530 = vpack.c.b16 %v1130, %v1122
      %v1531 = vpack.c.b16 %v1131, %v1123
      %v1532 = vpack.c.b16 %v1132, %v1124
      %v1533 = vpack.c.b16 %v1133, %v1125
      %v1534 = vpack.c.b16 %v1134, %v1126
      %v1535 = vpack.c.b16 %v1135, %v1127
      %v1536 = vpack.c.b16 %v1136, %v1128
      %v1537 = vpack.c.b16 %v1145, %v1137
      %v1538 = vpack.c.b16 %v1146, %v1138
      %v1539 = vpack.c.b16 %v1147, %v1139
      %v1540 = vpack.c.b16 %v1148, %v1140
      %v1541 = vpack.c.b16 %v1149, %v1141
      %v1542 = vpack.c.b16 %v1150, %v1142
      %v1543 = vpack.c.b16 %v1151, %v1143
      %v1544 = vpack.c.b16 %v1152, %v1144
      %v1545 = vpack.c.b16 %v1161, %v1153
      %v1546 = vpack.c.b16 %v1162, %v1154
      %v1547 = vpack.c.b16 %v1163, %v1155
      %v1548 = vpack.c.b16 %v1164, %v1156
      %v1549 = vpack.c.b16 %v1165, %v1157
      %v1550 = vpack.c.b16 %v1166, %v1158
      %v1551 = vpack.c.b16 %v1167, %v1159
      %v1552 = vpack.c.b16 %v1168, %v1160
      %v1553 = vpack.c.b16 %v1177, %v1169
      %v1554 = vpack.c.b16 %v1178, %v1170
      %v1555 = vpack.c.b16 %v1179, %v1171
      %v1556 = vpack.c.b16 %v1180, %v1172
      %v1557 = vpack.c.b16 %v1181, %v1173
      %v1558 = vpack.c.b16 %v1182, %v1174
      %v1559 = vpack.c.b16 %v1183, %v1175
      %v1560 = vpack.c.b16 %v1184, %v1176
      %v1561 = vpack.c.b16 %v1193, %v1185
      %v1562 = vpack.c.b16 %v1194, %v1186
      %v1563 = vpack.c.b16 %v1195, %v1187
      %v1564 = vpack.c.b16 %v1196, %v1188
      %v1565 = vpack.c.b16 %v1197, %v1189
      %v1566 = vpack.c.b16 %v1198, %v1190
      %v1567 = vpack.c.b16 %v1199, %v1191
      %v1568 = vpack.c.b16 %v1200, %v1192
      %v1569 = vpack.c.b16 %v1209, %v1201
      %v1570 = vpack.c.b16 %v1210, %v1202
      %v1571 = vpack.c.b16 %v1211, %v1203
      %v1572 = vpack.c.b16 %v1212, %v1204
      %v1573 = vpack.c.b16 %v1213, %v1205
      %v1574 = vpack.c.b16 %v1214, %v1206
      %v1575 = vpack.c.b16 %v1215, %v1207
      %v1576 = vpack.c.b16 %v1216, %v1208
      %v1577 = vpack.c.b16 %v1225, %v1217
      %v1578 = vpack.c.b16 %v1226, %v1218
      %v1579 = vpack.c.b16 %v1227, %v1219
      %v1580 = vpack.c.b16 %v1228, %v1220
      %v1581 = vpack.c.b16 %v1229, %v1221
      %v1582 = vpack.c.b16 %v1230, %v1222
      %v1583 = vpack.c.b16 %v1231, %v1223
      %v1584 = vpack.c.b16 %v1232, %v1224
      %v1585 = vpack.c.b16 %v1241, %v1233
      %v1586 = vpack.c.b16 %v1242, %v1234
      %v1587 = vpack.c.b16 %v1243, %v1235
      %v1588 = vpack.c.b16 %v1244, %v1236
      %v1589 = vpack.c.b16 %v1245, %v1237
      %v1590 = vpack.c.b16 %v1246, %v1238
      %v1591 = vpack.c.b16 %v1247, %v1239
      %v1592 = vpack.c.b16 %v1248, %v1240
      %v1593 = vpack.c.b16 %v1257, %v1249
      %v1594 = vpack.c.b16 %v1258, %v1250
      %v1595 = vpack.c.b16 %v1259, %v1251
      %v1596 = vpack.c.b16 %v1260, %v1252
      %v1597 = vpack.c.b16 %v1261, %v1253
      %v1598 = vpack.c.b16 %v1262, %v1254
      %v1599 = vpack.c.b16 %v1263, %v1255
      %v1600 = vpack.c.b16 %v1264, %v1256
      %v1601 = vpack.c.b16 %v1273, %v1265
      %v1602 = vpack.c.b16 %v1274, %v1266
      %v1603 = vpack.c.b16 %v1275, %v1267
      %v1604 = vpack.c.b16 %v1276, %v1268
      %v1605 = vpack.c.b16 %v1277, %v1269
      %v1606 = vpack.c.b16 %v1278, %v1270
      %v1607 = vpack.c.b16 %v1279, %v1271
      %v1608 = vpack.c.b16 %v1280, %v1272
      %v1609 = vpack.c.b16 %v1289, %v1281
      %v1610 = vpack.c.b16 %v1290, %v1282
      %v1611 = vpack.c.b16 %v1291, %v1283
      %v1612 = vpack.c.b16 %v1292, %v1284
      %v1613 = vpack.c.b16 %v1293, %v1285
      %v1614 = vpack.c.b16 %v1294, %v1286
      %v1615 = vpack.c.b16 %v1295, %v1287
      %v1616 = vpack.c.b16 %v1296, %v1288
      %v1617 = vpack.c.b16 %v1305, %v1297
      %v1618 = vpack.c.b16 %v1306, %v1298
      %v1619 = vpack.c.b16 %v1307, %v1299
      %v1620 = vpack.c.b16 %v1308, %v1300
      %v1621 = vpack.c.b16 %v1309, %v1301
      %v1622 = vpack.c.b16 %v1310, %v1302
      %v1623 = vpack.c.b16 %v1311, %v1303
      %v1624 = vpack.c.b16 %v1312, %v1304
      %v1625 = vpack.c.b16 %v1321, %v1313
      %v1626 = vpack.c.b16 %v1322, %v1314
      %v1627 = vpack.c.b16 %v1323, %v1315
      %v1628 = vpack.c.b16 %v1324, %v1316
      %v1629 = vpack.c.b16 %v1325, %v1317
      %v1630 = vpack.c.b16 %v1326, %v1318
      %v1631 = vpack.c.b16 %v1327, %v1319
      %v1632 = vpack.c.b16 %v1328, %v1320
      %v1633 = vpack.c.b16 %v1337, %v1329
      %v1634 = vpack.c.b16 %v1338, %v1330
      %v1635 = vpack.c.b16 %v1339, %v1331
      %v1636 = vpack.c.b16 %v1340, %v1332
      %v1637 = vpack.c.b16 %v1341, %v1333
      %v1638 = vpack.c.b16 %v1342, %v1334
      %v1639 = vpack.c.b16 %v1343, %v1335
      %v1640 = vpack.c.b16 %v1344, %v1336
      %v1641 = vpack.c.b16 %v1353, %v1345
      %v1642 = vpack.c.b16 %v1354, %v1346
      %v1643 = vpack.c.b16 %v1355, %v1347
      %v1644 = vpack.c.b16 %v1356, %v1348
      %v1645 = vpack.c.b16 %v1357, %v1349
      %v1646 = vpack.c.b16 %v1358, %v1350
      %v1647 = vpack.c.b16 %v1359, %v1351
      %v1648 = vpack.c.b16 %v1360, %v1352
      %v1649 = vpack.c.b16 %v1369, %v1361
      %v1650 = vpack.c.b16 %v1370, %v1362
      %v1651 = vpack.c.b16 %v1371, %v1363
      %v1652 = vpack.c.b16 %v1372, %v1364
      %v1653 = vpack.c.b16 %v1373, %v1365
      %v1654 = vpack.c.b16 %v1374, %v1366
      %v1655 = vpack.c.b16 %v1375, %v1367
      %v1656 = vpack.c.b16 %v1376, %v1368
      %v1657 = vpack.c.b16 %v1385, %v1377
      %v1658 = vpack.c.b16 %v1386, %v1378
      %v1659 = vpack.c.b16 %v1387, %v1379
      %v1660 = vpack.c.b16 %v1388, %v1380
      %v1661 = vpack.c.b16 %v1389, %v1381
      %v1662 = vpack.c.b16 %v1390, %v1382
      %v1663 = vpack.c.b16 %v1391, %v1383
      %v1664 = vpack.c.b16 %v1392, %v1384
      %v1665 = vpack.c.b16 %v1401, %v1393
      %v1666 = vpack.c.b16 %v1402, %v1394
      %v1667 = vpack.c.b16 %v1403, %v1395
      %v1668 = vpack.c.b16 %v1404, %v1396
      %v1669 = vpack.c.b16 %v1405, %v1397
      %v1670 = vpack.c.b16 %v1406, %v1398
      %v1671 = vpack.c.b16 %v1407, %v1399
      %v1672 = vpack.c.b16 %v1408, %v1400
      %v1673 = vpack.c.b16 %v1417, %v1409
      %v1674 = vpack.c.b16 %v1418, %v1410
      %v1675 = vpack.c.b16 %v1419, %v1411
      %v1676 = vpack.c.b16 %v1420, %v1412
      %v1677 = vpack.c.b16 %v1421, %v1413
      %v1678 = vpack.c.b16 %v1422, %v1414
      %v1679 = vpack.c.b16 %v1423, %v1415
      %v1680 = vpack.c.b16 %v1424, %v1416
      %1937 = vmatpush.bf16.msra.mxu0 %v1481
      %1938 = vmatpush.bf16.msra.mxu0 %v1473
      %1939 = vmatpush.bf16.msra.mxu0 %v1465
      %1940 = vmatpush.bf16.msra.mxu0 %v1457
      %1941 = vmatpush.bf16.msra.mxu0 %v1449
      %1942 = vmatpush.bf16.msra.mxu0 %v1441
      %1943 = vmatpush.bf16.msra.mxu0 %v1433
      %1944 = vmatpush.bf16.msra.mxu0 %v1425
      %1945 = vmatmul.bf16.gmra.mxu0 %v379
      %v1946 = vpop.f32.mrf.mxu0
      %v1947 = vadd.f32 %v641, %v1946
      %v1948 = vpop.f32.mrf.mxu0
      %1949 = vdwg.mxu0
      %1950 = vmatpush.bf16.msra.mxu0 %v1545
      %1951 = vmatpush.bf16.msra.mxu0 %v1537
      %1952 = vmatpush.bf16.msra.mxu0 %v1529
      %1953 = vmatpush.bf16.msra.mxu0 %v1521
      %1954 = vmatpush.bf16.msra.mxu0 %v1513
      %1955 = vmatpush.bf16.msra.mxu0 %v1505
      %1956 = vmatpush.bf16.msra.mxu0 %v1497
      %1957 = vmatpush.bf16.msra.mxu0 %v1489
      %1958 = vmatmul.bf16.gmra.mxu0 %v380
      %v1959 = vpop.f32.mrf.mxu0
      %v1960 = vadd.f32 %v1947, %v1959
      %v1961 = vpop.f32.mrf.mxu0
      %1962 = vdwg.mxu0
      %1963 = vmatpush.bf16.msra.mxu0 %v1609
      %1964 = vmatpush.bf16.msra.mxu0 %v1601
      %1965 = vmatpush.bf16.msra.mxu0 %v1593
      %1966 = vmatpush.bf16.msra.mxu0 %v1585
      %1967 = vmatpush.bf16.msra.mxu0 %v1577
      %1968 = vmatpush.bf16.msra.mxu0 %v1569
      %1969 = vmatpush.bf16.msra.mxu0 %v1561
      %1970 = vmatpush.bf16.msra.mxu0 %v1553
      %1971 = vmatmul.bf16.gmra.mxu0 %v381
      %v1972 = vpop.f32.mrf.mxu0
      %v1973 = vadd.f32 %v1960, %v1972
      %v1974 = vpop.f32.mrf.mxu0
      %1975 = vdwg.mxu0
      %1976 = vmatpush.bf16.msra.mxu0 %v1673
      %1977 = vmatpush.bf16.msra.mxu0 %v1665
      %1978 = vmatpush.bf16.msra.mxu0 %v1657
      %1979 = vmatpush.bf16.msra.mxu0 %v1649
      %1980 = vmatpush.bf16.msra.mxu0 %v1641
      %1981 = vmatpush.bf16.msra.mxu0 %v1633
      %1982 = vmatpush.bf16.msra.mxu0 %v1625
      %1983 = vmatpush.bf16.msra.mxu0 %v1617
      %1984 = vmatmul.bf16.gmra.mxu0 %v382
      %v1985 = vpop.f32.mrf.mxu0
      %v1986 = vadd.f32 %v1973, %v1985
      %v1987 = vpop.f32.mrf.mxu0
      %1988 = vdwg.mxu0
      %1989 = vmatpush.bf16.msra.mxu0 %v1482
      %1990 = vmatpush.bf16.msra.mxu0 %v1474
      %1991 = vmatpush.bf16.msra.mxu0 %v1466
      %1992 = vmatpush.bf16.msra.mxu0 %v1458
      %1993 = vmatpush.bf16.msra.mxu0 %v1450
      %1994 = vmatpush.bf16.msra.mxu0 %v1442
      %1995 = vmatpush.bf16.msra.mxu0 %v1434
      %1996 = vmatpush.bf16.msra.mxu0 %v1426
      %1997 = vmatmul.bf16.gmra.mxu0 %v379
      %v1998 = vpop.f32.mrf.mxu0
      %v1999 = vadd.f32 %v642, %v1998
      %v2000 = vpop.f32.mrf.mxu0
      %2001 = vdwg.mxu0
      %2002 = vmatpush.bf16.msra.mxu0 %v1546
      %2003 = vmatpush.bf16.msra.mxu0 %v1538
      %2004 = vmatpush.bf16.msra.mxu0 %v1530
      %2005 = vmatpush.bf16.msra.mxu0 %v1522
      %2006 = vmatpush.bf16.msra.mxu0 %v1514
      %2007 = vmatpush.bf16.msra.mxu0 %v1506
      %2008 = vmatpush.bf16.msra.mxu0 %v1498
      %2009 = vmatpush.bf16.msra.mxu0 %v1490
      %2010 = vmatmul.bf16.gmra.mxu0 %v380
      %v2011 = vpop.f32.mrf.mxu0
      %v2012 = vadd.f32 %v1999, %v2011
      %v2013 = vpop.f32.mrf.mxu0
      %2014 = vdwg.mxu0
      %2015 = vmatpush.bf16.msra.mxu0 %v1610
      %2016 = vmatpush.bf16.msra.mxu0 %v1602
      %2017 = vmatpush.bf16.msra.mxu0 %v1594
      %2018 = vmatpush.bf16.msra.mxu0 %v1586
      %2019 = vmatpush.bf16.msra.mxu0 %v1578
      %2020 = vmatpush.bf16.msra.mxu0 %v1570
      %2021 = vmatpush.bf16.msra.mxu0 %v1562
      %2022 = vmatpush.bf16.msra.mxu0 %v1554
      %2023 = vmatmul.bf16.gmra.mxu0 %v381
      %v2024 = vpop.f32.mrf.mxu0
      %v2025 = vadd.f32 %v2012, %v2024
      %v2026 = vpop.f32.mrf.mxu0
      %2027 = vdwg.mxu0
      %2028 = vmatpush.bf16.msra.mxu0 %v1674
      %2029 = vmatpush.bf16.msra.mxu0 %v1666
      %2030 = vmatpush.bf16.msra.mxu0 %v1658
      %2031 = vmatpush.bf16.msra.mxu0 %v1650
      %2032 = vmatpush.bf16.msra.mxu0 %v1642
      %2033 = vmatpush.bf16.msra.mxu0 %v1634
      %2034 = vmatpush.bf16.msra.mxu0 %v1626
      %2035 = vmatpush.bf16.msra.mxu0 %v1618
      %2036 = vmatmul.bf16.gmra.mxu0 %v382
      %v2037 = vpop.f32.mrf.mxu0
      %v2038 = vadd.f32 %v2025, %v2037
      %v2039 = vpop.f32.mrf.mxu0
      %2040 = vdwg.mxu0
      %2041 = vmatpush.bf16.msra.mxu0 %v1483
      %2042 = vmatpush.bf16.msra.mxu0 %v1475
      %2043 = vmatpush.bf16.msra.mxu0 %v1467
      %2044 = vmatpush.bf16.msra.mxu0 %v1459
      %2045 = vmatpush.bf16.msra.mxu0 %v1451
      %2046 = vmatpush.bf16.msra.mxu0 %v1443
      %2047 = vmatpush.bf16.msra.mxu0 %v1435
      %2048 = vmatpush.bf16.msra.mxu0 %v1427
      %2049 = vmatmul.bf16.gmra.mxu0 %v379
      %v2050 = vpop.f32.mrf.mxu0
      %v2051 = vadd.f32 %v643, %v2050
      %v2052 = vpop.f32.mrf.mxu0
      %2053 = vdwg.mxu0
      %2054 = vmatpush.bf16.msra.mxu0 %v1547
      %2055 = vmatpush.bf16.msra.mxu0 %v1539
      %2056 = vmatpush.bf16.msra.mxu0 %v1531
      %2057 = vmatpush.bf16.msra.mxu0 %v1523
      %2058 = vmatpush.bf16.msra.mxu0 %v1515
      %2059 = vmatpush.bf16.msra.mxu0 %v1507
      %2060 = vmatpush.bf16.msra.mxu0 %v1499
      %2061 = vmatpush.bf16.msra.mxu0 %v1491
      %2062 = vmatmul.bf16.gmra.mxu0 %v380
      %v2063 = vpop.f32.mrf.mxu0
      %v2064 = vadd.f32 %v2051, %v2063
      %v2065 = vpop.f32.mrf.mxu0
      %2066 = vdwg.mxu0
      %2067 = vmatpush.bf16.msra.mxu0 %v1611
      %2068 = vmatpush.bf16.msra.mxu0 %v1603
      %2069 = vmatpush.bf16.msra.mxu0 %v1595
      %2070 = vmatpush.bf16.msra.mxu0 %v1587
      %2071 = vmatpush.bf16.msra.mxu0 %v1579
      %2072 = vmatpush.bf16.msra.mxu0 %v1571
      %2073 = vmatpush.bf16.msra.mxu0 %v1563
      %2074 = vmatpush.bf16.msra.mxu0 %v1555
      %2075 = vmatmul.bf16.gmra.mxu0 %v381
      %v2076 = vpop.f32.mrf.mxu0
      %v2077 = vadd.f32 %v2064, %v2076
      %v2078 = vpop.f32.mrf.mxu0
      %2079 = vdwg.mxu0
      %2080 = vmatpush.bf16.msra.mxu0 %v1675
      %2081 = vmatpush.bf16.msra.mxu0 %v1667
      %2082 = vmatpush.bf16.msra.mxu0 %v1659
      %2083 = vmatpush.bf16.msra.mxu0 %v1651
      %2084 = vmatpush.bf16.msra.mxu0 %v1643
      %2085 = vmatpush.bf16.msra.mxu0 %v1635
      %2086 = vmatpush.bf16.msra.mxu0 %v1627
      %2087 = vmatpush.bf16.msra.mxu0 %v1619
      %2088 = vmatmul.bf16.gmra.mxu0 %v382
      %v2089 = vpop.f32.mrf.mxu0
      %v2090 = vadd.f32 %v2077, %v2089
      %v2091 = vpop.f32.mrf.mxu0
      %2092 = vdwg.mxu0
      %2093 = vmatpush.bf16.msra.mxu0 %v1484
      %2094 = vmatpush.bf16.msra.mxu0 %v1476
      %2095 = vmatpush.bf16.msra.mxu0 %v1468
      %2096 = vmatpush.bf16.msra.mxu0 %v1460
      %2097 = vmatpush.bf16.msra.mxu0 %v1452
      %2098 = vmatpush.bf16.msra.mxu0 %v1444
      %2099 = vmatpush.bf16.msra.mxu0 %v1436
      %2100 = vmatpush.bf16.msra.mxu0 %v1428
      %2101 = vmatmul.bf16.gmra.mxu0 %v379
      %v2102 = vpop.f32.mrf.mxu0
      %v2103 = vadd.f32 %v644, %v2102
      %v2104 = vpop.f32.mrf.mxu0
      %2105 = vdwg.mxu0
      %2106 = vmatpush.bf16.msra.mxu0 %v1548
      %2107 = vmatpush.bf16.msra.mxu0 %v1540
      %2108 = vmatpush.bf16.msra.mxu0 %v1532
      %2109 = vmatpush.bf16.msra.mxu0 %v1524
      %2110 = vmatpush.bf16.msra.mxu0 %v1516
      %2111 = vmatpush.bf16.msra.mxu0 %v1508
      %2112 = vmatpush.bf16.msra.mxu0 %v1500
      %2113 = vmatpush.bf16.msra.mxu0 %v1492
      %2114 = vmatmul.bf16.gmra.mxu0 %v380
      %v2115 = vpop.f32.mrf.mxu0
      %v2116 = vadd.f32 %v2103, %v2115
      %v2117 = vpop.f32.mrf.mxu0
      %2118 = vdwg.mxu0
      %2119 = vmatpush.bf16.msra.mxu0 %v1612
      %2120 = vmatpush.bf16.msra.mxu0 %v1604
      %2121 = vmatpush.bf16.msra.mxu0 %v1596
      %2122 = vmatpush.bf16.msra.mxu0 %v1588
      %2123 = vmatpush.bf16.msra.mxu0 %v1580
      %2124 = vmatpush.bf16.msra.mxu0 %v1572
      %2125 = vmatpush.bf16.msra.mxu0 %v1564
      %2126 = vmatpush.bf16.msra.mxu0 %v1556
      %2127 = vmatmul.bf16.gmra.mxu0 %v381
      %v2128 = vpop.f32.mrf.mxu0
      %v2129 = vadd.f32 %v2116, %v2128
      %v2130 = vpop.f32.mrf.mxu0
      %2131 = vdwg.mxu0
      %2132 = vmatpush.bf16.msra.mxu0 %v1676
      %2133 = vmatpush.bf16.msra.mxu0 %v1668
      %2134 = vmatpush.bf16.msra.mxu0 %v1660
      %2135 = vmatpush.bf16.msra.mxu0 %v1652
      %2136 = vmatpush.bf16.msra.mxu0 %v1644
      %2137 = vmatpush.bf16.msra.mxu0 %v1636
      %2138 = vmatpush.bf16.msra.mxu0 %v1628
      %2139 = vmatpush.bf16.msra.mxu0 %v1620
      %2140 = vmatmul.bf16.gmra.mxu0 %v382
      %v2141 = vpop.f32.mrf.mxu0
      %v2142 = vadd.f32 %v2129, %v2141
      %v2143 = vpop.f32.mrf.mxu0
      %2144 = vdwg.mxu0
      %2145 = vmatpush.bf16.msra.mxu0 %v1485
      %2146 = vmatpush.bf16.msra.mxu0 %v1477
      %2147 = vmatpush.bf16.msra.mxu0 %v1469
      %2148 = vmatpush.bf16.msra.mxu0 %v1461
      %2149 = vmatpush.bf16.msra.mxu0 %v1453
      %2150 = vmatpush.bf16.msra.mxu0 %v1445
      %2151 = vmatpush.bf16.msra.mxu0 %v1437
      %2152 = vmatpush.bf16.msra.mxu0 %v1429
      %2153 = vmatmul.bf16.gmra.mxu0 %v379
      %v2154 = vpop.f32.mrf.mxu0
      %v2155 = vadd.f32 %v645, %v2154
      %v2156 = vpop.f32.mrf.mxu0
      %2157 = vdwg.mxu0
      %2158 = vmatpush.bf16.msra.mxu0 %v1549
      %2159 = vmatpush.bf16.msra.mxu0 %v1541
      %2160 = vmatpush.bf16.msra.mxu0 %v1533
      %2161 = vmatpush.bf16.msra.mxu0 %v1525
      %2162 = vmatpush.bf16.msra.mxu0 %v1517
      %2163 = vmatpush.bf16.msra.mxu0 %v1509
      %2164 = vmatpush.bf16.msra.mxu0 %v1501
      %2165 = vmatpush.bf16.msra.mxu0 %v1493
      %2166 = vmatmul.bf16.gmra.mxu0 %v380
      %v2167 = vpop.f32.mrf.mxu0
      %v2168 = vadd.f32 %v2155, %v2167
      %v2169 = vpop.f32.mrf.mxu0
      %2170 = vdwg.mxu0
      %2171 = vmatpush.bf16.msra.mxu0 %v1613
      %2172 = vmatpush.bf16.msra.mxu0 %v1605
      %2173 = vmatpush.bf16.msra.mxu0 %v1597
      %2174 = vmatpush.bf16.msra.mxu0 %v1589
      %2175 = vmatpush.bf16.msra.mxu0 %v1581
      %2176 = vmatpush.bf16.msra.mxu0 %v1573
      %2177 = vmatpush.bf16.msra.mxu0 %v1565
      %2178 = vmatpush.bf16.msra.mxu0 %v1557
      %2179 = vmatmul.bf16.gmra.mxu0 %v381
      %v2180 = vpop.f32.mrf.mxu0
      %v2181 = vadd.f32 %v2168, %v2180
      %v2182 = vpop.f32.mrf.mxu0
      %2183 = vdwg.mxu0
      %2184 = vmatpush.bf16.msra.mxu0 %v1677
      %2185 = vmatpush.bf16.msra.mxu0 %v1669
      %2186 = vmatpush.bf16.msra.mxu0 %v1661
      %2187 = vmatpush.bf16.msra.mxu0 %v1653
      %2188 = vmatpush.bf16.msra.mxu0 %v1645
      %2189 = vmatpush.bf16.msra.mxu0 %v1637
      %2190 = vmatpush.bf16.msra.mxu0 %v1629
      %2191 = vmatpush.bf16.msra.mxu0 %v1621
      %2192 = vmatmul.bf16.gmra.mxu0 %v382
      %v2193 = vpop.f32.mrf.mxu0
      %v2194 = vadd.f32 %v2181, %v2193
      %v2195 = vpop.f32.mrf.mxu0
      %2196 = vdwg.mxu0
      %2197 = vmatpush.bf16.msra.mxu0 %v1486
      %2198 = vmatpush.bf16.msra.mxu0 %v1478
      %2199 = vmatpush.bf16.msra.mxu0 %v1470
      %2200 = vmatpush.bf16.msra.mxu0 %v1462
      %2201 = vmatpush.bf16.msra.mxu0 %v1454
      %2202 = vmatpush.bf16.msra.mxu0 %v1446
      %2203 = vmatpush.bf16.msra.mxu0 %v1438
      %2204 = vmatpush.bf16.msra.mxu0 %v1430
      %2205 = vmatmul.bf16.gmra.mxu0 %v379
      %v2206 = vpop.f32.mrf.mxu0
      %v2207 = vadd.f32 %v646, %v2206
      %v2208 = vpop.f32.mrf.mxu0
      %2209 = vdwg.mxu0
      %2210 = vmatpush.bf16.msra.mxu0 %v1550
      %2211 = vmatpush.bf16.msra.mxu0 %v1542
      %2212 = vmatpush.bf16.msra.mxu0 %v1534
      %2213 = vmatpush.bf16.msra.mxu0 %v1526
      %2214 = vmatpush.bf16.msra.mxu0 %v1518
      %2215 = vmatpush.bf16.msra.mxu0 %v1510
      %2216 = vmatpush.bf16.msra.mxu0 %v1502
      %2217 = vmatpush.bf16.msra.mxu0 %v1494
      %2218 = vmatmul.bf16.gmra.mxu0 %v380
      %v2219 = vpop.f32.mrf.mxu0
      %v2220 = vadd.f32 %v2207, %v2219
      %v2221 = vpop.f32.mrf.mxu0
      %2222 = vdwg.mxu0
      %2223 = vmatpush.bf16.msra.mxu0 %v1614
      %2224 = vmatpush.bf16.msra.mxu0 %v1606
      %2225 = vmatpush.bf16.msra.mxu0 %v1598
      %2226 = vmatpush.bf16.msra.mxu0 %v1590
      %2227 = vmatpush.bf16.msra.mxu0 %v1582
      %2228 = vmatpush.bf16.msra.mxu0 %v1574
      %2229 = vmatpush.bf16.msra.mxu0 %v1566
      %2230 = vmatpush.bf16.msra.mxu0 %v1558
      %2231 = vmatmul.bf16.gmra.mxu0 %v381
      %v2232 = vpop.f32.mrf.mxu0
      %v2233 = vadd.f32 %v2220, %v2232
      %v2234 = vpop.f32.mrf.mxu0
      %2235 = vdwg.mxu0
      %2236 = vmatpush.bf16.msra.mxu0 %v1678
      %2237 = vmatpush.bf16.msra.mxu0 %v1670
      %2238 = vmatpush.bf16.msra.mxu0 %v1662
      %2239 = vmatpush.bf16.msra.mxu0 %v1654
      %2240 = vmatpush.bf16.msra.mxu0 %v1646
      %2241 = vmatpush.bf16.msra.mxu0 %v1638
      %2242 = vmatpush.bf16.msra.mxu0 %v1630
      %2243 = vmatpush.bf16.msra.mxu0 %v1622
      %2244 = vmatmul.bf16.gmra.mxu0 %v382
      %v2245 = vpop.f32.mrf.mxu0
      %v2246 = vadd.f32 %v2233, %v2245
      %v2247 = vpop.f32.mrf.mxu0
      %2248 = vdwg.mxu0
      %2249 = vmatpush.bf16.msra.mxu0 %v1487
      %2250 = vmatpush.bf16.msra.mxu0 %v1479
      %2251 = vmatpush.bf16.msra.mxu0 %v1471
      %2252 = vmatpush.bf16.msra.mxu0 %v1463
      %2253 = vmatpush.bf16.msra.mxu0 %v1455
      %2254 = vmatpush.bf16.msra.mxu0 %v1447
      %2255 = vmatpush.bf16.msra.mxu0 %v1439
      %2256 = vmatpush.bf16.msra.mxu0 %v1431
      %2257 = vmatmul.bf16.gmra.mxu0 %v379
      %v2258 = vpop.f32.mrf.mxu0
      %v2259 = vadd.f32 %v647, %v2258
      %v2260 = vpop.f32.mrf.mxu0
      %2261 = vdwg.mxu0
      %2262 = vmatpush.bf16.msra.mxu0 %v1551
      %2263 = vmatpush.bf16.msra.mxu0 %v1543
      %2264 = vmatpush.bf16.msra.mxu0 %v1535
      %2265 = vmatpush.bf16.msra.mxu0 %v1527
      %2266 = vmatpush.bf16.msra.mxu0 %v1519
      %2267 = vmatpush.bf16.msra.mxu0 %v1511
      %2268 = vmatpush.bf16.msra.mxu0 %v1503
      %2269 = vmatpush.bf16.msra.mxu0 %v1495
      %2270 = vmatmul.bf16.gmra.mxu0 %v380
      %v2271 = vpop.f32.mrf.mxu0
      %v2272 = vadd.f32 %v2259, %v2271
      %v2273 = vpop.f32.mrf.mxu0
      %2274 = vdwg.mxu0
      %2275 = vmatpush.bf16.msra.mxu0 %v1615
      %2276 = vmatpush.bf16.msra.mxu0 %v1607
      %2277 = vmatpush.bf16.msra.mxu0 %v1599
      %2278 = vmatpush.bf16.msra.mxu0 %v1591
      %2279 = vmatpush.bf16.msra.mxu0 %v1583
      %2280 = vmatpush.bf16.msra.mxu0 %v1575
      %2281 = vmatpush.bf16.msra.mxu0 %v1567
      %2282 = vmatpush.bf16.msra.mxu0 %v1559
      %2283 = vmatmul.bf16.gmra.mxu0 %v381
      %v2284 = vpop.f32.mrf.mxu0
      %v2285 = vadd.f32 %v2272, %v2284
      %v2286 = vpop.f32.mrf.mxu0
      %2287 = vdwg.mxu0
      %2288 = vmatpush.bf16.msra.mxu0 %v1679
      %2289 = vmatpush.bf16.msra.mxu0 %v1671
      %2290 = vmatpush.bf16.msra.mxu0 %v1663
      %2291 = vmatpush.bf16.msra.mxu0 %v1655
      %2292 = vmatpush.bf16.msra.mxu0 %v1647
      %2293 = vmatpush.bf16.msra.mxu0 %v1639
      %2294 = vmatpush.bf16.msra.mxu0 %v1631
      %2295 = vmatpush.bf16.msra.mxu0 %v1623
      %2296 = vmatmul.bf16.gmra.mxu0 %v382
      %v2297 = vpop.f32.mrf.mxu0
      %v2298 = vadd.f32 %v2285, %v2297
      %v2299 = vpop.f32.mrf.mxu0
      %2300 = vdwg.mxu0
      %2301 = vmatpush.bf16.msra.mxu0 %v1488
      %2302 = vmatpush.bf16.msra.mxu0 %v1480
      %2303 = vmatpush.bf16.msra.mxu0 %v1472
      %2304 = vmatpush.bf16.msra.mxu0 %v1464
      %2305 = vmatpush.bf16.msra.mxu0 %v1456
      %2306 = vmatpush.bf16.msra.mxu0 %v1448
      %2307 = vmatpush.bf16.msra.mxu0 %v1440
      %2308 = vmatpush.bf16.msra.mxu0 %v1432
      %2309 = vmatmul.bf16.gmra.mxu0 %v379
      %v2310 = vpop.f32.mrf.mxu0
      %v2311 = vadd.f32 %v648, %v2310
      %v2312 = vpop.f32.mrf.mxu0
      %2313 = vdwg.mxu0
      %2314 = vmatpush.bf16.msra.mxu0 %v1552
      %2315 = vmatpush.bf16.msra.mxu0 %v1544
      %2316 = vmatpush.bf16.msra.mxu0 %v1536
      %2317 = vmatpush.bf16.msra.mxu0 %v1528
      %2318 = vmatpush.bf16.msra.mxu0 %v1520
      %2319 = vmatpush.bf16.msra.mxu0 %v1512
      %2320 = vmatpush.bf16.msra.mxu0 %v1504
      %2321 = vmatpush.bf16.msra.mxu0 %v1496
      %2322 = vmatmul.bf16.gmra.mxu0 %v380
      %v2323 = vpop.f32.mrf.mxu0
      %v2324 = vadd.f32 %v2311, %v2323
      %v2325 = vpop.f32.mrf.mxu0
      %2326 = vdwg.mxu0
      %2327 = vmatpush.bf16.msra.mxu0 %v1616
      %2328 = vmatpush.bf16.msra.mxu0 %v1608
      %2329 = vmatpush.bf16.msra.mxu0 %v1600
      %2330 = vmatpush.bf16.msra.mxu0 %v1592
      %2331 = vmatpush.bf16.msra.mxu0 %v1584
      %2332 = vmatpush.bf16.msra.mxu0 %v1576
      %2333 = vmatpush.bf16.msra.mxu0 %v1568
      %2334 = vmatpush.bf16.msra.mxu0 %v1560
      %2335 = vmatmul.bf16.gmra.mxu0 %v381
      %v2336 = vpop.f32.mrf.mxu0
      %v2337 = vadd.f32 %v2324, %v2336
      %v2338 = vpop.f32.mrf.mxu0
      %2339 = vdwg.mxu0
      %2340 = vmatpush.bf16.msra.mxu0 %v1680
      %2341 = vmatpush.bf16.msra.mxu0 %v1672
      %2342 = vmatpush.bf16.msra.mxu0 %v1664
      %2343 = vmatpush.bf16.msra.mxu0 %v1656
      %2344 = vmatpush.bf16.msra.mxu0 %v1648
      %2345 = vmatpush.bf16.msra.mxu0 %v1640
      %2346 = vmatpush.bf16.msra.mxu0 %v1632
      %2347 = vmatpush.bf16.msra.mxu0 %v1624
      %2348 = vmatmul.bf16.gmra.mxu0 %v382
      %v2349 = vpop.f32.mrf.mxu0
      %v2350 = vadd.f32 %v2337, %v2349
      %v2351 = vpop.f32.mrf.mxu0
      %2352 = vdwg.mxu0
      %v2353 = vmax.f32 %v1986, 0.0
      %v2354 = vmax.f32 %v2038, 0.0
      %v2355 = vmax.f32 %v2090, 0.0
      %v2356 = vmax.f32 %v2142, 0.0
      %v2357 = vmax.f32 %v2194, 0.0
      %v2358 = vmax.f32 %v2246, 0.0
      %v2359 = vmax.f32 %v2298, 0.0
      %v2360 = vmax.f32 %v2350, 0.0
      %v2361 = vpack.c.bf16 %v2354, %v2353
      %v2362 = vpack.c.bf16 %v2356, %v2355
      %v2363 = vpack.c.bf16 %v2358, %v2357
      %v2364 = vpack.c.bf16 %v2360, %v2359
      %2365 = vst [vmem:[#allocation2] sm:$0xff] %v2361
      %2366 = vst [vmem:[#allocation2 + $0x8] sm:$0xff] %v2362
      %2367 = vst [vmem:[#allocation2 + $0x10] sm:$0xff] %v2363
      %2368 = vst [vmem:[#allocation2 + $0x18] sm:$0xff] %v2364
    $region57: #{tpu_custom_call.1} parent=1 // pred_fallthru
      _
    %v2369 = vld [vmem:[#allocation2] sm:$0xff]
    %v2370 = vld [vmem:[#allocation2 + $0x8] sm:$0xff]
    %v2371 = vld [vmem:[#allocation2 + $0x10] sm:$0xff]
    %v2372 = vld [vmem:[#allocation2 + $0x18] sm:$0xff]
    %v2373 = vld [vmem:[#allocation12] sm:$0xff]
    %v2374 = vld [vmem:[#allocation12 + $0x8] sm:$0xff]
    %v2375 = vld [vmem:[#allocation12 + $0x10] sm:$0xff]
    %v2376 = vld [vmem:[#allocation12 + $0x18] sm:$0xff]
    %v2377 = vld [vmem:[#allocation12 + $0x20] sm:$0xff]
    %v2378 = vld [vmem:[#allocation12 + $0x28] sm:$0xff]
    %v2379 = vld [vmem:[#allocation12 + $0x30] sm:$0xff]
    %v2380 = vld [vmem:[#allocation12 + $0x38] sm:$0xff]
    %v2381 = vld [vmem:[#allocation12 + $0x40] sm:$0xff]
    %v2382 = vld [vmem:[#allocation12 + $0x48] sm:$0xff]
    %v2383 = vld [vmem:[#allocation12 + $0x50] sm:$0xff]
    %v2384 = vld [vmem:[#allocation12 + $0x58] sm:$0xff]
    %v2385 = vld [vmem:[#allocation12 + $0x60] sm:$0xff]
    %v2386 = vld [vmem:[#allocation12 + $0x68] sm:$0xff]
    %v2387 = vld [vmem:[#allocation12 + $0x70] sm:$0xff]
    %v2388 = vld [vmem:[#allocation12 + $0x78] sm:$0xff]
    %v2389 = vld [vmem:[#allocation12 + $0x80] sm:$0xff]
    %v2390 = vld [vmem:[#allocation12 + $0x88] sm:$0xff]
    %v2391 = vld [vmem:[#allocation12 + $0x90] sm:$0xff]
    %v2392 = vld [vmem:[#allocation12 + $0x98] sm:$0xff]
    %v2393 = vld [vmem:[#allocation12 + $0xa0] sm:$0xff]
    %v2394 = vld [vmem:[#allocation12 + $0xa8] sm:$0xff]
    %v2395 = vld [vmem:[#allocation12 + $0xb0] sm:$0xff]
    %v2396 = vld [vmem:[#allocation12 + $0xb8] sm:$0xff]
    %v2397 = vld [vmem:[#allocation12 + $0xc0] sm:$0xff]
    %v2398 = vld [vmem:[#allocation12 + $0xc8] sm:$0xff]
    %v2399 = vld [vmem:[#allocation12 + $0xd0] sm:$0xff]
    %v2400 = vld [vmem:[#allocation12 + $0xd8] sm:$0xff]
    %v2401 = vld [vmem:[#allocation12 + $0xe0] sm:$0xff]
    %v2402 = vld [vmem:[#allocation12 + $0xe8] sm:$0xff]
    %v2403 = vld [vmem:[#allocation12 + $0xf0] sm:$0xff]
    %v2404 = vld [vmem:[#allocation12 + $0xf8] sm:$0xff]
    %v2405 = vld [vmem:[#allocation12 + $0x100] sm:$0xff]
    %v2406 = vld [vmem:[#allocation12 + $0x108] sm:$0xff]
    %v2407 = vld [vmem:[#allocation12 + $0x110] sm:$0xff]
    %v2408 = vld [vmem:[#allocation12 + $0x118] sm:$0xff]
    %v2409 = vld [vmem:[#allocation12 + $0x120] sm:$0xff]
    %v2410 = vld [vmem:[#allocation12 + $0x128] sm:$0xff]
    %v2411 = vld [vmem:[#allocation12 + $0x130] sm:$0xff]
    %v2412 = vld [vmem:[#allocation12 + $0x138] sm:$0xff]
    %v2413 = vld [vmem:[#allocation12 + $0x140] sm:$0xff]
    %v2414 = vld [vmem:[#allocation12 + $0x148] sm:$0xff]
    %v2415 = vld [vmem:[#allocation12 + $0x150] sm:$0xff]
    %v2416 = vld [vmem:[#allocation12 + $0x158] sm:$0xff]
    %v2417 = vld [vmem:[#allocation12 + $0x160] sm:$0xff]
    %v2418 = vld [vmem:[#allocation12 + $0x168] sm:$0xff]
    %v2419 = vld [vmem:[#allocation12 + $0x170] sm:$0xff]
    %v2420 = vld [vmem:[#allocation12 + $0x178] sm:$0xff]
    %v2421 = vld [vmem:[#allocation12 + $0x180] sm:$0xff]
    %v2422 = vld [vmem:[#allocation12 + $0x188] sm:$0xff]
    %v2423 = vld [vmem:[#allocation12 + $0x190] sm:$0xff]
    %v2424 = vld [vmem:[#allocation12 + $0x198] sm:$0xff]
    %v2425 = vld [vmem:[#allocation12 + $0x1a0] sm:$0xff]
    %v2426 = vld [vmem:[#allocation12 + $0x1a8] sm:$0xff]
    %v2427 = vld [vmem:[#allocation12 + $0x1b0] sm:$0xff]
    %v2428 = vld [vmem:[#allocation12 + $0x1b8] sm:$0xff]
    %v2429 = vld [vmem:[#allocation12 + $0x1c0] sm:$0xff]
    %v2430 = vld [vmem:[#allocation12 + $0x1c8] sm:$0xff]
    %v2431 = vld [vmem:[#allocation12 + $0x1d0] sm:$0xff]
    %v2432 = vld [vmem:[#allocation12 + $0x1d8] sm:$0xff]
    %v2433 = vld [vmem:[#allocation12 + $0x1e0] sm:$0xff]
    %v2434 = vld [vmem:[#allocation12 + $0x1e8] sm:$0xff]
    %v2435 = vld [vmem:[#allocation12 + $0x1f0] sm:$0xff]
    %v2436 = vld [vmem:[#allocation12 + $0x1f8] sm:$0xff]
    %v2437 = vld [vmem:[#allocation12 + $0x200] sm:$0xff]
    %v2438 = vld [vmem:[#allocation12 + $0x208] sm:$0xff]
    %v2439 = vld [vmem:[#allocation12 + $0x210] sm:$0xff]
    %v2440 = vld [vmem:[#allocation12 + $0x218] sm:$0xff]
    %v2441 = vld [vmem:[#allocation12 + $0x220] sm:$0xff]
    %v2442 = vld [vmem:[#allocation12 + $0x228] sm:$0xff]
    %v2443 = vld [vmem:[#allocation12 + $0x230] sm:$0xff]
    %v2444 = vld [vmem:[#allocation12 + $0x238] sm:$0xff]
    %v2445 = vld [vmem:[#allocation12 + $0x240] sm:$0xff]
    %v2446 = vld [vmem:[#allocation12 + $0x248] sm:$0xff]
    %v2447 = vld [vmem:[#allocation12 + $0x250] sm:$0xff]
    %v2448 = vld [vmem:[#allocation12 + $0x258] sm:$0xff]
    %v2449 = vld [vmem:[#allocation12 + $0x260] sm:$0xff]
    %v2450 = vld [vmem:[#allocation12 + $0x268] sm:$0xff]
    %v2451 = vld [vmem:[#allocation12 + $0x270] sm:$0xff]
    %v2452 = vld [vmem:[#allocation12 + $0x278] sm:$0xff]
    %v2453 = vld [vmem:[#allocation12 + $0x280] sm:$0xff]
    %v2454 = vld [vmem:[#allocation12 + $0x288] sm:$0xff]
    %v2455 = vld [vmem:[#allocation12 + $0x290] sm:$0xff]
    %v2456 = vld [vmem:[#allocation12 + $0x298] sm:$0xff]
    %v2457 = vld [vmem:[#allocation12 + $0x2a0] sm:$0xff]
    %v2458 = vld [vmem:[#allocation12 + $0x2a8] sm:$0xff]
    %v2459 = vld [vmem:[#allocation12 + $0x2b0] sm:$0xff]
    %v2460 = vld [vmem:[#allocation12 + $0x2b8] sm:$0xff]
    %v2461 = vld [vmem:[#allocation12 + $0x2c0] sm:$0xff]
    %v2462 = vld [vmem:[#allocation12 + $0x2c8] sm:$0xff]
    %v2463 = vld [vmem:[#allocation12 + $0x2d0] sm:$0xff]
    %v2464 = vld [vmem:[#allocation12 + $0x2d8] sm:$0xff]
    %v2465 = vld [vmem:[#allocation12 + $0x2e0] sm:$0xff]
    %v2466 = vld [vmem:[#allocation12 + $0x2e8] sm:$0xff]
    %v2467 = vld [vmem:[#allocation12 + $0x2f0] sm:$0xff]
    %v2468 = vld [vmem:[#allocation12 + $0x2f8] sm:$0xff]
    %v2469 = vld [vmem:[#allocation12 + $0x300] sm:$0xff]
    %v2470 = vld [vmem:[#allocation12 + $0x308] sm:$0xff]
    %v2471 = vld [vmem:[#allocation12 + $0x310] sm:$0xff]
    %v2472 = vld [vmem:[#allocation12 + $0x318] sm:$0xff]
    %v2473 = vld [vmem:[#allocation12 + $0x320] sm:$0xff]
    %v2474 = vld [vmem:[#allocation12 + $0x328] sm:$0xff]
    %v2475 = vld [vmem:[#allocation12 + $0x330] sm:$0xff]
    %v2476 = vld [vmem:[#allocation12 + $0x338] sm:$0xff]
    %v2477 = vld [vmem:[#allocation12 + $0x340] sm:$0xff]
    %v2478 = vld [vmem:[#allocation12 + $0x348] sm:$0xff]
    %v2479 = vld [vmem:[#allocation12 + $0x350] sm:$0xff]
    %v2480 = vld [vmem:[#allocation12 + $0x358] sm:$0xff]
    %v2481 = vld [vmem:[#allocation12 + $0x360] sm:$0xff]
    %v2482 = vld [vmem:[#allocation12 + $0x368] sm:$0xff]
    %v2483 = vld [vmem:[#allocation12 + $0x370] sm:$0xff]
    %v2484 = vld [vmem:[#allocation12 + $0x378] sm:$0xff]
    %v2485 = vld [vmem:[#allocation12 + $0x380] sm:$0xff]
    %v2486 = vld [vmem:[#allocation12 + $0x388] sm:$0xff]
    %v2487 = vld [vmem:[#allocation12 + $0x390] sm:$0xff]
    %v2488 = vld [vmem:[#allocation12 + $0x398] sm:$0xff]
    %v2489 = vld [vmem:[#allocation12 + $0x3a0] sm:$0xff]
    %v2490 = vld [vmem:[#allocation12 + $0x3a8] sm:$0xff]
    %v2491 = vld [vmem:[#allocation12 + $0x3b0] sm:$0xff]
    %v2492 = vld [vmem:[#allocation12 + $0x3b8] sm:$0xff]
    %v2493 = vld [vmem:[#allocation12 + $0x3c0] sm:$0xff]
    %v2494 = vld [vmem:[#allocation12 + $0x3c8] sm:$0xff]
    %v2495 = vld [vmem:[#allocation12 + $0x3d0] sm:$0xff]
    %v2496 = vld [vmem:[#allocation12 + $0x3d8] sm:$0xff]
    %v2497 = vld [vmem:[#allocation12 + $0x3e0] sm:$0xff]
    %v2498 = vld [vmem:[#allocation12 + $0x3e8] sm:$0xff]
    %v2499 = vld [vmem:[#allocation12 + $0x3f0] sm:$0xff]
    %v2500 = vld [vmem:[#allocation12 + $0x3f8] sm:$0xff]
    %v2501 = vld [vmem:[%s6] sm:$0x3]
    %v2503 = vperm.slane %v2501, 0
    %v2504 = vperm.slane %v2501, 1
    %v2511 = vunpack.c.l.b16 %v2369
    %v2512 = vunpack.c.h.b16 %v2369
    %v2513 = vunpack.c.l.b16 %v2370
    %v2514 = vunpack.c.h.b16 %v2370
    %v2515 = vunpack.c.l.b16 %v2371
    %v2516 = vunpack.c.h.b16 %v2371
    %v2517 = vunpack.c.l.b16 %v2372
    %v2518 = vunpack.c.h.b16 %v2372
    %v2519 = vpack.c.b16 %v2511, %v2511
    %v2520 = vpack.c.b16 %v2512, %v2512
    %v2521 = vpack.c.b16 %v2513, %v2513
    %v2522 = vpack.c.b16 %v2514, %v2514
    %v2523 = vpack.c.b16 %v2515, %v2515
    %v2524 = vpack.c.b16 %v2516, %v2516
    %v2525 = vpack.c.b16 %v2517, %v2517
    %v2526 = vpack.c.b16 %v2518, %v2518
    %v2663 = vunpack.c.l.b16 %v2373
    %v2664 = vunpack.c.h.b16 %v2373
    %v2665 = vunpack.c.l.b16 %v2374
    %v2666 = vunpack.c.h.b16 %v2374
    %v2667 = vunpack.c.l.b16 %v2375
    %v2668 = vunpack.c.h.b16 %v2375
    %v2669 = vunpack.c.l.b16 %v2376
    %v2670 = vunpack.c.h.b16 %v2376
    %v2671 = vunpack.c.l.b16 %v2377
    %v2672 = vunpack.c.h.b16 %v2377
    %v2673 = vunpack.c.l.b16 %v2378
    %v2674 = vunpack.c.h.b16 %v2378
    %v2675 = vunpack.c.l.b16 %v2379
    %v2676 = vunpack.c.h.b16 %v2379
    %v2677 = vunpack.c.l.b16 %v2380
    %v2678 = vunpack.c.h.b16 %v2380
    %v2679 = vunpack.c.l.b16 %v2381
    %v2680 = vunpack.c.h.b16 %v2381
    %v2681 = vunpack.c.l.b16 %v2382
    %v2682 = vunpack.c.h.b16 %v2382
    %v2683 = vunpack.c.l.b16 %v2383
    %v2684 = vunpack.c.h.b16 %v2383
    %v2685 = vunpack.c.l.b16 %v2384
    %v2686 = vunpack.c.h.b16 %v2384
    %v2687 = vunpack.c.l.b16 %v2385
    %v2688 = vunpack.c.h.b16 %v2385
    %v2689 = vunpack.c.l.b16 %v2386
    %v2690 = vunpack.c.h.b16 %v2386
    %v2691 = vunpack.c.l.b16 %v2387
    %v2692 = vunpack.c.h.b16 %v2387
    %v2693 = vunpack.c.l.b16 %v2388
    %v2694 = vunpack.c.h.b16 %v2388
    %v2695 = vunpack.c.l.b16 %v2389
    %v2696 = vunpack.c.h.b16 %v2389
    %v2697 = vunpack.c.l.b16 %v2390
    %v2698 = vunpack.c.h.b16 %v2390
    %v2699 = vunpack.c.l.b16 %v2391
    %v2700 = vunpack.c.h.b16 %v2391
    %v2701 = vunpack.c.l.b16 %v2392
    %v2702 = vunpack.c.h.b16 %v2392
    %v2703 = vunpack.c.l.b16 %v2393
    %v2704 = vunpack.c.h.b16 %v2393
    %v2705 = vunpack.c.l.b16 %v2394
    %v2706 = vunpack.c.h.b16 %v2394
    %v2707 = vunpack.c.l.b16 %v2395
    %v2708 = vunpack.c.h.b16 %v2395
    %v2709 = vunpack.c.l.b16 %v2396
    %v2710 = vunpack.c.h.b16 %v2396
    %v2711 = vunpack.c.l.b16 %v2397
    %v2712 = vunpack.c.h.b16 %v2397
    %v2713 = vunpack.c.l.b16 %v2398
    %v2714 = vunpack.c.h.b16 %v2398
    %v2715 = vunpack.c.l.b16 %v2399
    %v2716 = vunpack.c.h.b16 %v2399
    %v2717 = vunpack.c.l.b16 %v2400
    %v2718 = vunpack.c.h.b16 %v2400
    %v2719 = vunpack.c.l.b16 %v2401
    %v2720 = vunpack.c.h.b16 %v2401
    %v2721 = vunpack.c.l.b16 %v2402
    %v2722 = vunpack.c.h.b16 %v2402
    %v2723 = vunpack.c.l.b16 %v2403
    %v2724 = vunpack.c.h.b16 %v2403
    %v2725 = vunpack.c.l.b16 %v2404
    %v2726 = vunpack.c.h.b16 %v2404
    %v2727 = vunpack.c.l.b16 %v2405
    %v2728 = vunpack.c.h.b16 %v2405
    %v2729 = vunpack.c.l.b16 %v2406
    %v2730 = vunpack.c.h.b16 %v2406
    %v2731 = vunpack.c.l.b16 %v2407
    %v2732 = vunpack.c.h.b16 %v2407
    %v2733 = vunpack.c.l.b16 %v2408
    %v2734 = vunpack.c.h.b16 %v2408
    %v2735 = vunpack.c.l.b16 %v2409
    %v2736 = vunpack.c.h.b16 %v2409
    %v2737 = vunpack.c.l.b16 %v2410
    %v2738 = vunpack.c.h.b16 %v2410
    %v2739 = vunpack.c.l.b16 %v2411
    %v2740 = vunpack.c.h.b16 %v2411
    %v2741 = vunpack.c.l.b16 %v2412
    %v2742 = vunpack.c.h.b16 %v2412
    %v2743 = vunpack.c.l.b16 %v2413
    %v2744 = vunpack.c.h.b16 %v2413
    %v2745 = vunpack.c.l.b16 %v2414
    %v2746 = vunpack.c.h.b16 %v2414
    %v2747 = vunpack.c.l.b16 %v2415
    %v2748 = vunpack.c.h.b16 %v2415
    %v2749 = vunpack.c.l.b16 %v2416
    %v2750 = vunpack.c.h.b16 %v2416
    %v2751 = vunpack.c.l.b16 %v2417
    %v2752 = vunpack.c.h.b16 %v2417
    %v2753 = vunpack.c.l.b16 %v2418
    %v2754 = vunpack.c.h.b16 %v2418
    %v2755 = vunpack.c.l.b16 %v2419
    %v2756 = vunpack.c.h.b16 %v2419
    %v2757 = vunpack.c.l.b16 %v2420
    %v2758 = vunpack.c.h.b16 %v2420
    %v2759 = vunpack.c.l.b16 %v2421
    %v2760 = vunpack.c.h.b16 %v2421
    %v2761 = vunpack.c.l.b16 %v2422
    %v2762 = vunpack.c.h.b16 %v2422
    %v2763 = vunpack.c.l.b16 %v2423
    %v2764 = vunpack.c.h.b16 %v2423
    %v2765 = vunpack.c.l.b16 %v2424
    %v2766 = vunpack.c.h.b16 %v2424
    %v2767 = vunpack.c.l.b16 %v2425
    %v2768 = vunpack.c.h.b16 %v2425
    %v2769 = vunpack.c.l.b16 %v2426
    %v2770 = vunpack.c.h.b16 %v2426
    %v2771 = vunpack.c.l.b16 %v2427
    %v2772 = vunpack.c.h.b16 %v2427
    %v2773 = vunpack.c.l.b16 %v2428
    %v2774 = vunpack.c.h.b16 %v2428
    %v2775 = vunpack.c.l.b16 %v2429
    %v2776 = vunpack.c.h.b16 %v2429
    %v2777 = vunpack.c.l.b16 %v2430
    %v2778 = vunpack.c.h.b16 %v2430
    %v2779 = vunpack.c.l.b16 %v2431
    %v2780 = vunpack.c.h.b16 %v2431
    %v2781 = vunpack.c.l.b16 %v2432
    %v2782 = vunpack.c.h.b16 %v2432
    %v2783 = vunpack.c.l.b16 %v2433
    %v2784 = vunpack.c.h.b16 %v2433
    %v2785 = vunpack.c.l.b16 %v2434
    %v2786 = vunpack.c.h.b16 %v2434
    %v2787 = vunpack.c.l.b16 %v2435
    %v2788 = vunpack.c.h.b16 %v2435
    %v2789 = vunpack.c.l.b16 %v2436
    %v2790 = vunpack.c.h.b16 %v2436
    %v2791 = vunpack.c.l.b16 %v2437
    %v2792 = vunpack.c.h.b16 %v2437
    %v2793 = vunpack.c.l.b16 %v2438
    %v2794 = vunpack.c.h.b16 %v2438
    %v2795 = vunpack.c.l.b16 %v2439
    %v2796 = vunpack.c.h.b16 %v2439
    %v2797 = vunpack.c.l.b16 %v2440
    %v2798 = vunpack.c.h.b16 %v2440
    %v2799 = vunpack.c.l.b16 %v2441
    %v2800 = vunpack.c.h.b16 %v2441
    %v2801 = vunpack.c.l.b16 %v2442
    %v2802 = vunpack.c.h.b16 %v2442
    %v2803 = vunpack.c.l.b16 %v2443
    %v2804 = vunpack.c.h.b16 %v2443
    %v2805 = vunpack.c.l.b16 %v2444
    %v2806 = vunpack.c.h.b16 %v2444
    %v2807 = vunpack.c.l.b16 %v2445
    %v2808 = vunpack.c.h.b16 %v2445
    %v2809 = vunpack.c.l.b16 %v2446
    %v2810 = vunpack.c.h.b16 %v2446
    %v2811 = vunpack.c.l.b16 %v2447
    %v2812 = vunpack.c.h.b16 %v2447
    %v2813 = vunpack.c.l.b16 %v2448
    %v2814 = vunpack.c.h.b16 %v2448
    %v2815 = vunpack.c.l.b16 %v2449
    %v2816 = vunpack.c.h.b16 %v2449
    %v2817 = vunpack.c.l.b16 %v2450
    %v2818 = vunpack.c.h.b16 %v2450
    %v2819 = vunpack.c.l.b16 %v2451
    %v2820 = vunpack.c.h.b16 %v2451
    %v2821 = vunpack.c.l.b16 %v2452
    %v2822 = vunpack.c.h.b16 %v2452
    %v2823 = vunpack.c.l.b16 %v2453
    %v2824 = vunpack.c.h.b16 %v2453
    %v2825 = vunpack.c.l.b16 %v2454
    %v2826 = vunpack.c.h.b16 %v2454
    %v2827 = vunpack.c.l.b16 %v2455
    %v2828 = vunpack.c.h.b16 %v2455
    %v2829 = vunpack.c.l.b16 %v2456
    %v2830 = vunpack.c.h.b16 %v2456
    %v2831 = vunpack.c.l.b16 %v2457
    %v2832 = vunpack.c.h.b16 %v2457
    %v2833 = vunpack.c.l.b16 %v2458
    %v2834 = vunpack.c.h.b16 %v2458
    %v2835 = vunpack.c.l.b16 %v2459
    %v2836 = vunpack.c.h.b16 %v2459
    %v2837 = vunpack.c.l.b16 %v2460
    %v2838 = vunpack.c.h.b16 %v2460
    %v2839 = vunpack.c.l.b16 %v2461
    %v2840 = vunpack.c.h.b16 %v2461
    %v2841 = vunpack.c.l.b16 %v2462
    %v2842 = vunpack.c.h.b16 %v2462
    %v2843 = vunpack.c.l.b16 %v2463
    %v2844 = vunpack.c.h.b16 %v2463
    %v2845 = vunpack.c.l.b16 %v2464
    %v2846 = vunpack.c.h.b16 %v2464
    %v2847 = vunpack.c.l.b16 %v2465
    %v2848 = vunpack.c.h.b16 %v2465
    %v2849 = vunpack.c.l.b16 %v2466
    %v2850 = vunpack.c.h.b16 %v2466
    %v2851 = vunpack.c.l.b16 %v2467
    %v2852 = vunpack.c.h.b16 %v2467
    %v2853 = vunpack.c.l.b16 %v2468
    %v2854 = vunpack.c.h.b16 %v2468
    %v2855 = vunpack.c.l.b16 %v2469
    %v2856 = vunpack.c.h.b16 %v2469
    %v2857 = vunpack.c.l.b16 %v2470
    %v2858 = vunpack.c.h.b16 %v2470
    %v2859 = vunpack.c.l.b16 %v2471
    %v2860 = vunpack.c.h.b16 %v2471
    %v2861 = vunpack.c.l.b16 %v2472
    %v2862 = vunpack.c.h.b16 %v2472
    %v2863 = vunpack.c.l.b16 %v2473
    %v2864 = vunpack.c.h.b16 %v2473
    %v2865 = vunpack.c.l.b16 %v2474
    %v2866 = vunpack.c.h.b16 %v2474
    %v2867 = vunpack.c.l.b16 %v2475
    %v2868 = vunpack.c.h.b16 %v2475
    %v2869 = vunpack.c.l.b16 %v2476
    %v2870 = vunpack.c.h.b16 %v2476
    %v2871 = vunpack.c.l.b16 %v2477
    %v2872 = vunpack.c.h.b16 %v2477
    %v2873 = vunpack.c.l.b16 %v2478
    %v2874 = vunpack.c.h.b16 %v2478
    %v2875 = vunpack.c.l.b16 %v2479
    %v2876 = vunpack.c.h.b16 %v2479
    %v2877 = vunpack.c.l.b16 %v2480
    %v2878 = vunpack.c.h.b16 %v2480
    %v2879 = vunpack.c.l.b16 %v2481
    %v2880 = vunpack.c.h.b16 %v2481
    %v2881 = vunpack.c.l.b16 %v2482
    %v2882 = vunpack.c.h.b16 %v2482
    %v2883 = vunpack.c.l.b16 %v2483
    %v2884 = vunpack.c.h.b16 %v2483
    %v2885 = vunpack.c.l.b16 %v2484
    %v2886 = vunpack.c.h.b16 %v2484
    %v2887 = vunpack.c.l.b16 %v2485
    %v2888 = vunpack.c.h.b16 %v2485
    %v2889 = vunpack.c.l.b16 %v2486
    %v2890 = vunpack.c.h.b16 %v2486
    %v2891 = vunpack.c.l.b16 %v2487
    %v2892 = vunpack.c.h.b16 %v2487
    %v2893 = vunpack.c.l.b16 %v2488
    %v2894 = vunpack.c.h.b16 %v2488
    %v2895 = vunpack.c.l.b16 %v2489
    %v2896 = vunpack.c.h.b16 %v2489
    %v2897 = vunpack.c.l.b16 %v2490
    %v2898 = vunpack.c.h.b16 %v2490
    %v2899 = vunpack.c.l.b16 %v2491
    %v2900 = vunpack.c.h.b16 %v2491
    %v2901 = vunpack.c.l.b16 %v2492
    %v2902 = vunpack.c.h.b16 %v2492
    %v2903 = vunpack.c.l.b16 %v2493
    %v2904 = vunpack.c.h.b16 %v2493
    %v2905 = vunpack.c.l.b16 %v2494
    %v2906 = vunpack.c.h.b16 %v2494
    %v2907 = vunpack.c.l.b16 %v2495
    %v2908 = vunpack.c.h.b16 %v2495
    %v2909 = vunpack.c.l.b16 %v2496
    %v2910 = vunpack.c.h.b16 %v2496
    %v2911 = vunpack.c.l.b16 %v2497
    %v2912 = vunpack.c.h.b16 %v2497
    %v2913 = vunpack.c.l.b16 %v2498
    %v2914 = vunpack.c.h.b16 %v2498
    %v2915 = vunpack.c.l.b16 %v2499
    %v2916 = vunpack.c.h.b16 %v2499
    %v2917 = vunpack.c.l.b16 %v2500
    %v2918 = vunpack.c.h.b16 %v2500
    %v2919 = vpack.c.b16 %v2665, %v2663
    %v2920 = vpack.c.b16 %v2666, %v2664
    %v2921 = vpack.c.b16 %v2669, %v2667
    %v2922 = vpack.c.b16 %v2670, %v2668
    %v2923 = vpack.c.b16 %v2673, %v2671
    %v2924 = vpack.c.b16 %v2674, %v2672
    %v2925 = vpack.c.b16 %v2677, %v2675
    %v2926 = vpack.c.b16 %v2678, %v2676
    %v2927 = vpack.c.b16 %v2681, %v2679
    %v2928 = vpack.c.b16 %v2682, %v2680
    %v2929 = vpack.c.b16 %v2685, %v2683
    %v2930 = vpack.c.b16 %v2686, %v2684
    %v2931 = vpack.c.b16 %v2689, %v2687
    %v2932 = vpack.c.b16 %v2690, %v2688
    %v2933 = vpack.c.b16 %v2693, %v2691
    %v2934 = vpack.c.b16 %v2694, %v2692
    %v2935 = vpack.c.b16 %v2697, %v2695
    %v2936 = vpack.c.b16 %v2698, %v2696
    %v2937 = vpack.c.b16 %v2701, %v2699
    %v2938 = vpack.c.b16 %v2702, %v2700
    %v2939 = vpack.c.b16 %v2705, %v2703
    %v2940 = vpack.c.b16 %v2706, %v2704
    %v2941 = vpack.c.b16 %v2709, %v2707
    %v2942 = vpack.c.b16 %v2710, %v2708
    %v2943 = vpack.c.b16 %v2713, %v2711
    %v2944 = vpack.c.b16 %v2714, %v2712
    %v2945 = vpack.c.b16 %v2717, %v2715
    %v2946 = vpack.c.b16 %v2718, %v2716
    %v2947 = vpack.c.b16 %v2721, %v2719
    %v2948 = vpack.c.b16 %v2722, %v2720
    %v2949 = vpack.c.b16 %v2725, %v2723
    %v2950 = vpack.c.b16 %v2726, %v2724
    %v2951 = vpack.c.b16 %v2729, %v2727
    %v2952 = vpack.c.b16 %v2730, %v2728
    %v2953 = vpack.c.b16 %v2733, %v2731
    %v2954 = vpack.c.b16 %v2734, %v2732
    %v2955 = vpack.c.b16 %v2737, %v2735
    %v2956 = vpack.c.b16 %v2738, %v2736
    %v2957 = vpack.c.b16 %v2741, %v2739
    %v2958 = vpack.c.b16 %v2742, %v2740
    %v2959 = vpack.c.b16 %v2745, %v2743
    %v2960 = vpack.c.b16 %v2746, %v2744
    %v2961 = vpack.c.b16 %v2749, %v2747
    %v2962 = vpack.c.b16 %v2750, %v2748
    %v2963 = vpack.c.b16 %v2753, %v2751
    %v2964 = vpack.c.b16 %v2754, %v2752
    %v2965 = vpack.c.b16 %v2757, %v2755
    %v2966 = vpack.c.b16 %v2758, %v2756
    %v2967 = vpack.c.b16 %v2761, %v2759
    %v2968 = vpack.c.b16 %v2762, %v2760
    %v2969 = vpack.c.b16 %v2765, %v2763
    %v2970 = vpack.c.b16 %v2766, %v2764
    %v2971 = vpack.c.b16 %v2769, %v2767
    %v2972 = vpack.c.b16 %v2770, %v2768
    %v2973 = vpack.c.b16 %v2773, %v2771
    %v2974 = vpack.c.b16 %v2774, %v2772
    %v2975 = vpack.c.b16 %v2777, %v2775
    %v2976 = vpack.c.b16 %v2778, %v2776
    %v2977 = vpack.c.b16 %v2781, %v2779
    %v2978 = vpack.c.b16 %v2782, %v2780
    %v2979 = vpack.c.b16 %v2785, %v2783
    %v2980 = vpack.c.b16 %v2786, %v2784
    %v2981 = vpack.c.b16 %v2789, %v2787
    %v2982 = vpack.c.b16 %v2790, %v2788
    %v2983 = vpack.c.b16 %v2793, %v2791
    %v2984 = vpack.c.b16 %v2794, %v2792
    %v2985 = vpack.c.b16 %v2797, %v2795
    %v2986 = vpack.c.b16 %v2798, %v2796
    %v2987 = vpack.c.b16 %v2801, %v2799
    %v2988 = vpack.c.b16 %v2802, %v2800
    %v2989 = vpack.c.b16 %v2805, %v2803
    %v2990 = vpack.c.b16 %v2806, %v2804
    %v2991 = vpack.c.b16 %v2809, %v2807
    %v2992 = vpack.c.b16 %v2810, %v2808
    %v2993 = vpack.c.b16 %v2813, %v2811
    %v2994 = vpack.c.b16 %v2814, %v2812
    %v2995 = vpack.c.b16 %v2817, %v2815
    %v2996 = vpack.c.b16 %v2818, %v2816
    %v2997 = vpack.c.b16 %v2821, %v2819
    %v2998 = vpack.c.b16 %v2822, %v2820
    %v2999 = vpack.c.b16 %v2825, %v2823
    %v3000 = vpack.c.b16 %v2826, %v2824
    %v3001 = vpack.c.b16 %v2829, %v2827
    %v3002 = vpack.c.b16 %v2830, %v2828
    %v3003 = vpack.c.b16 %v2833, %v2831
    %v3004 = vpack.c.b16 %v2834, %v2832
    %v3005 = vpack.c.b16 %v2837, %v2835
    %v3006 = vpack.c.b16 %v2838, %v2836
    %v3007 = vpack.c.b16 %v2841, %v2839
    %v3008 = vpack.c.b16 %v2842, %v2840
    %v3009 = vpack.c.b16 %v2845, %v2843
    %v3010 = vpack.c.b16 %v2846, %v2844
    %v3011 = vpack.c.b16 %v2849, %v2847
    %v3012 = vpack.c.b16 %v2850, %v2848
    %v3013 = vpack.c.b16 %v2853, %v2851
    %v3014 = vpack.c.b16 %v2854, %v2852
    %v3015 = vpack.c.b16 %v2857, %v2855
    %v3016 = vpack.c.b16 %v2858, %v2856
    %v3017 = vpack.c.b16 %v2861, %v2859
    %v3018 = vpack.c.b16 %v2862, %v2860
    %v3019 = vpack.c.b16 %v2865, %v2863
    %v3020 = vpack.c.b16 %v2866, %v2864
    %v3021 = vpack.c.b16 %v2869, %v2867
    %v3022 = vpack.c.b16 %v2870, %v2868
    %v3023 = vpack.c.b16 %v2873, %v2871
    %v3024 = vpack.c.b16 %v2874, %v2872
    %v3025 = vpack.c.b16 %v2877, %v2875
    %v3026 = vpack.c.b16 %v2878, %v2876
    %v3027 = vpack.c.b16 %v2881, %v2879
    %v3028 = vpack.c.b16 %v2882, %v2880
    %v3029 = vpack.c.b16 %v2885, %v2883
    %v3030 = vpack.c.b16 %v2886, %v2884
    %v3031 = vpack.c.b16 %v2889, %v2887
    %v3032 = vpack.c.b16 %v2890, %v2888
    %v3033 = vpack.c.b16 %v2893, %v2891
    %v3034 = vpack.c.b16 %v2894, %v2892
    %v3035 = vpack.c.b16 %v2897, %v2895
    %v3036 = vpack.c.b16 %v2898, %v2896
    %v3037 = vpack.c.b16 %v2901, %v2899
    %v3038 = vpack.c.b16 %v2902, %v2900
    %v3039 = vpack.c.b16 %v2905, %v2903
    %v3040 = vpack.c.b16 %v2906, %v2904
    %v3041 = vpack.c.b16 %v2909, %v2907
    %v3042 = vpack.c.b16 %v2910, %v2908
    %v3043 = vpack.c.b16 %v2913, %v2911
    %v3044 = vpack.c.b16 %v2914, %v2912
    %v3045 = vpack.c.b16 %v2917, %v2915
    %v3046 = vpack.c.b16 %v2918, %v2916
    %3175 = vmatpush.bf16.msra.mxu0 %v2933
    %3176 = vmatpush.bf16.msra.mxu0 %v2931
    %3177 = vmatpush.bf16.msra.mxu0 %v2929
    %3178 = vmatpush.bf16.msra.mxu0 %v2927
    %3179 = vmatpush.bf16.msra.mxu0 %v2925
    %3180 = vmatpush.bf16.msra.mxu0 %v2923
    %3181 = vmatpush.bf16.msra.mxu0 %v2921
    %3182 = vmatpush.bf16.msra.mxu0 %v2919
    %3183 = vmatmul.bf16.gmra.mxu0 %v2519
    %v3184 = vpop.f32.mrf.mxu0
    %v3185 = vadd.f32 %v2503, %v3184
    %v3186 = vpop.f32.mrf.mxu0
    %3187 = vdwg.mxu0
    %3188 = vmatpush.bf16.msra.mxu0 %v2949
    %3189 = vmatpush.bf16.msra.mxu0 %v2947
    %3190 = vmatpush.bf16.msra.mxu0 %v2945
    %3191 = vmatpush.bf16.msra.mxu0 %v2943
    %3192 = vmatpush.bf16.msra.mxu0 %v2941
    %3193 = vmatpush.bf16.msra.mxu0 %v2939
    %3194 = vmatpush.bf16.msra.mxu0 %v2937
    %3195 = vmatpush.bf16.msra.mxu0 %v2935
    %3196 = vmatmul.bf16.gmra.mxu0 %v2520
    %v3197 = vpop.f32.mrf.mxu0
    %v3198 = vadd.f32 %v3185, %v3197
    %v3199 = vpop.f32.mrf.mxu0
    %3200 = vdwg.mxu0
    %3201 = vmatpush.bf16.msra.mxu0 %v2965
    %3202 = vmatpush.bf16.msra.mxu0 %v2963
    %3203 = vmatpush.bf16.msra.mxu0 %v2961
    %3204 = vmatpush.bf16.msra.mxu0 %v2959
    %3205 = vmatpush.bf16.msra.mxu0 %v2957
    %3206 = vmatpush.bf16.msra.mxu0 %v2955
    %3207 = vmatpush.bf16.msra.mxu0 %v2953
    %3208 = vmatpush.bf16.msra.mxu0 %v2951
    %3209 = vmatmul.bf16.gmra.mxu0 %v2521
    %v3210 = vpop.f32.mrf.mxu0
    %v3211 = vadd.f32 %v3198, %v3210
    %v3212 = vpop.f32.mrf.mxu0
    %3213 = vdwg.mxu0
    %3214 = vmatpush.bf16.msra.mxu0 %v2981
    %3215 = vmatpush.bf16.msra.mxu0 %v2979
    %3216 = vmatpush.bf16.msra.mxu0 %v2977
    %3217 = vmatpush.bf16.msra.mxu0 %v2975
    %3218 = vmatpush.bf16.msra.mxu0 %v2973
    %3219 = vmatpush.bf16.msra.mxu0 %v2971
    %3220 = vmatpush.bf16.msra.mxu0 %v2969
    %3221 = vmatpush.bf16.msra.mxu0 %v2967
    %3222 = vmatmul.bf16.gmra.mxu0 %v2522
    %v3223 = vpop.f32.mrf.mxu0
    %v3224 = vadd.f32 %v3211, %v3223
    %v3225 = vpop.f32.mrf.mxu0
    %3226 = vdwg.mxu0
    %3227 = vmatpush.bf16.msra.mxu0 %v2997
    %3228 = vmatpush.bf16.msra.mxu0 %v2995
    %3229 = vmatpush.bf16.msra.mxu0 %v2993
    %3230 = vmatpush.bf16.msra.mxu0 %v2991
    %3231 = vmatpush.bf16.msra.mxu0 %v2989
    %3232 = vmatpush.bf16.msra.mxu0 %v2987
    %3233 = vmatpush.bf16.msra.mxu0 %v2985
    %3234 = vmatpush.bf16.msra.mxu0 %v2983
    %3235 = vmatmul.bf16.gmra.mxu0 %v2523
    %v3236 = vpop.f32.mrf.mxu0
    %v3237 = vadd.f32 %v3224, %v3236
    %v3238 = vpop.f32.mrf.mxu0
    %3239 = vdwg.mxu0
    %3240 = vmatpush.bf16.msra.mxu0 %v3013
    %3241 = vmatpush.bf16.msra.mxu0 %v3011
    %3242 = vmatpush.bf16.msra.mxu0 %v3009
    %3243 = vmatpush.bf16.msra.mxu0 %v3007
    %3244 = vmatpush.bf16.msra.mxu0 %v3005
    %3245 = vmatpush.bf16.msra.mxu0 %v3003
    %3246 = vmatpush.bf16.msra.mxu0 %v3001
    %3247 = vmatpush.bf16.msra.mxu0 %v2999
    %3248 = vmatmul.bf16.gmra.mxu0 %v2524
    %v3249 = vpop.f32.mrf.mxu0
    %v3250 = vadd.f32 %v3237, %v3249
    %v3251 = vpop.f32.mrf.mxu0
    %3252 = vdwg.mxu0
    %3253 = vmatpush.bf16.msra.mxu0 %v3029
    %3254 = vmatpush.bf16.msra.mxu0 %v3027
    %3255 = vmatpush.bf16.msra.mxu0 %v3025
    %3256 = vmatpush.bf16.msra.mxu0 %v3023
    %3257 = vmatpush.bf16.msra.mxu0 %v3021
    %3258 = vmatpush.bf16.msra.mxu0 %v3019
    %3259 = vmatpush.bf16.msra.mxu0 %v3017
    %3260 = vmatpush.bf16.msra.mxu0 %v3015
    %3261 = vmatmul.bf16.gmra.mxu0 %v2525
    %v3262 = vpop.f32.mrf.mxu0
    %v3263 = vadd.f32 %v3250, %v3262
    %v3264 = vpop.f32.mrf.mxu0
    %3265 = vdwg.mxu0
    %3266 = vmatpush.bf16.msra.mxu0 %v3045
    %3267 = vmatpush.bf16.msra.mxu0 %v3043
    %3268 = vmatpush.bf16.msra.mxu0 %v3041
    %3269 = vmatpush.bf16.msra.mxu0 %v3039
    %3270 = vmatpush.bf16.msra.mxu0 %v3037
    %3271 = vmatpush.bf16.msra.mxu0 %v3035
    %3272 = vmatpush.bf16.msra.mxu0 %v3033
    %3273 = vmatpush.bf16.msra.mxu0 %v3031
    %3274 = vmatmul.bf16.gmra.mxu0 %v2526
    %v3275 = vpop.f32.mrf.mxu0
    %v3276 = vadd.f32 %v3263, %v3275
    %v3277 = vpop.f32.mrf.mxu0
    %3278 = vdwg.mxu0
    %3279 = vmatpush.bf16.msra.mxu0 %v2934
    %3280 = vmatpush.bf16.msra.mxu0 %v2932
    %3281 = vmatpush.bf16.msra.mxu0 %v2930
    %3282 = vmatpush.bf16.msra.mxu0 %v2928
    %3283 = vmatpush.bf16.msra.mxu0 %v2926
    %3284 = vmatpush.bf16.msra.mxu0 %v2924
    %3285 = vmatpush.bf16.msra.mxu0 %v2922
    %3286 = vmatpush.bf16.msra.mxu0 %v2920
    %3287 = vmatmul.bf16.gmra.mxu0 %v2519
    %v3288 = vpop.f32.mrf.mxu0
    %v3289 = vadd.f32 %v2504, %v3288
    %v3290 = vpop.f32.mrf.mxu0
    %3291 = vdwg.mxu0
    %3292 = vmatpush.bf16.msra.mxu0 %v2950
    %3293 = vmatpush.bf16.msra.mxu0 %v2948
    %3294 = vmatpush.bf16.msra.mxu0 %v2946
    %3295 = vmatpush.bf16.msra.mxu0 %v2944
    %3296 = vmatpush.bf16.msra.mxu0 %v2942
    %3297 = vmatpush.bf16.msra.mxu0 %v2940
    %3298 = vmatpush.bf16.msra.mxu0 %v2938
    %3299 = vmatpush.bf16.msra.mxu0 %v2936
    %3300 = vmatmul.bf16.gmra.mxu0 %v2520
    %v3301 = vpop.f32.mrf.mxu0
    %v3302 = vadd.f32 %v3289, %v3301
    %v3303 = vpop.f32.mrf.mxu0
    %3304 = vdwg.mxu0
    %3305 = vmatpush.bf16.msra.mxu0 %v2966
    %3306 = vmatpush.bf16.msra.mxu0 %v2964
    %3307 = vmatpush.bf16.msra.mxu0 %v2962
    %3308 = vmatpush.bf16.msra.mxu0 %v2960
    %3309 = vmatpush.bf16.msra.mxu0 %v2958
    %3310 = vmatpush.bf16.msra.mxu0 %v2956
    %3311 = vmatpush.bf16.msra.mxu0 %v2954
    %3312 = vmatpush.bf16.msra.mxu0 %v2952
    %3313 = vmatmul.bf16.gmra.mxu0 %v2521
    %v3314 = vpop.f32.mrf.mxu0
    %v3315 = vadd.f32 %v3302, %v3314
    %v3316 = vpop.f32.mrf.mxu0
    %3317 = vdwg.mxu0
    %3318 = vmatpush.bf16.msra.mxu0 %v2982
    %3319 = vmatpush.bf16.msra.mxu0 %v2980
    %3320 = vmatpush.bf16.msra.mxu0 %v2978
    %3321 = vmatpush.bf16.msra.mxu0 %v2976
    %3322 = vmatpush.bf16.msra.mxu0 %v2974
    %3323 = vmatpush.bf16.msra.mxu0 %v2972
    %3324 = vmatpush.bf16.msra.mxu0 %v2970
    %3325 = vmatpush.bf16.msra.mxu0 %v2968
    %3326 = vmatmul.bf16.gmra.mxu0 %v2522
    %v3327 = vpop.f32.mrf.mxu0
    %v3328 = vadd.f32 %v3315, %v3327
    %v3329 = vpop.f32.mrf.mxu0
    %3330 = vdwg.mxu0
    %3331 = vmatpush.bf16.msra.mxu0 %v2998
    %3332 = vmatpush.bf16.msra.mxu0 %v2996
    %3333 = vmatpush.bf16.msra.mxu0 %v2994
    %3334 = vmatpush.bf16.msra.mxu0 %v2992
    %3335 = vmatpush.bf16.msra.mxu0 %v2990
    %3336 = vmatpush.bf16.msra.mxu0 %v2988
    %3337 = vmatpush.bf16.msra.mxu0 %v2986
    %3338 = vmatpush.bf16.msra.mxu0 %v2984
    %3339 = vmatmul.bf16.gmra.mxu0 %v2523
    %v3340 = vpop.f32.mrf.mxu0
    %v3341 = vadd.f32 %v3328, %v3340
    %v3342 = vpop.f32.mrf.mxu0
    %3343 = vdwg.mxu0
    %3344 = vmatpush.bf16.msra.mxu0 %v3014
    %3345 = vmatpush.bf16.msra.mxu0 %v3012
    %3346 = vmatpush.bf16.msra.mxu0 %v3010
    %3347 = vmatpush.bf16.msra.mxu0 %v3008
    %3348 = vmatpush.bf16.msra.mxu0 %v3006
    %3349 = vmatpush.bf16.msra.mxu0 %v3004
    %3350 = vmatpush.bf16.msra.mxu0 %v3002
    %3351 = vmatpush.bf16.msra.mxu0 %v3000
    %3352 = vmatmul.bf16.gmra.mxu0 %v2524
    %v3353 = vpop.f32.mrf.mxu0
    %v3354 = vadd.f32 %v3341, %v3353
    %v3355 = vpop.f32.mrf.mxu0
    %3356 = vdwg.mxu0
    %3357 = vmatpush.bf16.msra.mxu0 %v3030
    %3358 = vmatpush.bf16.msra.mxu0 %v3028
    %3359 = vmatpush.bf16.msra.mxu0 %v3026
    %3360 = vmatpush.bf16.msra.mxu0 %v3024
    %3361 = vmatpush.bf16.msra.mxu0 %v3022
    %3362 = vmatpush.bf16.msra.mxu0 %v3020
    %3363 = vmatpush.bf16.msra.mxu0 %v3018
    %3364 = vmatpush.bf16.msra.mxu0 %v3016
    %3365 = vmatmul.bf16.gmra.mxu0 %v2525
    %v3366 = vpop.f32.mrf.mxu0
    %v3367 = vadd.f32 %v3354, %v3366
    %v3368 = vpop.f32.mrf.mxu0
    %3369 = vdwg.mxu0
    %3370 = vmatpush.bf16.msra.mxu0 %v3046
    %3371 = vmatpush.bf16.msra.mxu0 %v3044
    %3372 = vmatpush.bf16.msra.mxu0 %v3042
    %3373 = vmatpush.bf16.msra.mxu0 %v3040
    %3374 = vmatpush.bf16.msra.mxu0 %v3038
    %3375 = vmatpush.bf16.msra.mxu0 %v3036
    %3376 = vmatpush.bf16.msra.mxu0 %v3034
    %3377 = vmatpush.bf16.msra.mxu0 %v3032
    %3378 = vmatmul.bf16.gmra.mxu0 %v2526
    %v3379 = vpop.f32.mrf.mxu0
    %v3380 = vadd.f32 %v3367, %v3379
    %v3381 = vpop.f32.mrf.mxu0
    %3382 = vdwg.mxu0
    %3383 = vst [vmem:[#allocation14] sm:$0xff] %v3276
    %3384 = vst [vmem:[#allocation14 + $0x8] sm:$0xff] %v3380
    // Predicated region
    $region58: #{tpu_custom_call.1} parent=1 // pred_check
      _
    $region59: #{tpu_custom_call.1} parent=1 // pred_check_branch
      %3386 = sbr.rel (0) target = $region61
    $region60: #{tpu_custom_call.1} parent=1 // pred_region
      %3388 = vsyncadd [#allocation5], 0
      %s3390 = sshll.u32 [#allocation14], 4
      %s3391 = int_to_ptr.vmem [resolvable:$true] %s3390
      %s3392 = sshll.u32 %s7, 4
      %s3393 = int_to_ptr.hbm [resolvable:$true] %s3392
      %3395 = dma.vmem_to_hbm [thread:$0]  %s3391, 256, %s3393, [#allocation5]
    $region61: #{tpu_custom_call.1} parent=1 // pred_fallthru
      _
    // Predicated region
    $region62: #{tpu_custom_call.1} parent=1 // pred_check
      _
    $region63: #{tpu_custom_call.1} parent=1 // pred_check_branch
      %3397 = sbr.rel (0) target = $region65
    $region64: #{tpu_custom_call.1} parent=1 // pred_region
      %3399 = dma.done [#allocation5], 256
    $region65: #{tpu_custom_call.1} parent=1 // pred_fallthru
      _
    %3400 = vsyncpa [#allocation4], 1
    %3401 = vsyncpa [#allocation7], 1
    %3402 = vsyncpa [#allocation10], 1
    %3403 = vsyncpa [#allocation13], 1
    %3404 = vsyncpa [#allocation5], 1

</llo_original>
